<compile_context>
chip_gen: v5e
topology: v5e:2x2
jax: 0.10.0
libtpu: 0.0.40
codegen_flags: <defaults>
</compile_context>

<pallas_src>
import functools

import jax
import jax.numpy as jnp
from jax.experimental import pallas as pl
from jax.experimental.pallas import tpu as pltpu

_VMEM_LIMIT = 48 * 1024 * 1024   # leave headroom on v7x (64 MiB physical per TC)


# ----------------------------- tiling helpers ------------------------------

def _sublane_quantum(dtype):
    """Packed sublane tile height: 8 for f32, 16 for bf16, 32 for int8."""
    return max(8, 32 // jnp.dtype(dtype).itemsize)


def _pick_tile(dim, preferred, quantum):
    """Largest tile <= `preferred` that divides `dim` and is a multiple of `quantum`.
    Falls back to the full dim (always a legal Pallas block size).
    NOTE: for very large ragged dims the full-dim fallback could exceed VMEM; callers
    here always have dims that either fit or have a friendly divisor."""
    if dim <= preferred:
        return dim
    t = (preferred // quantum) * quantum
    while t >= quantum:
        if dim % t == 0:
            return t
        t -= quantum
    return dim


def _pick_head_block(num_heads, head_dim, other_parallel_blocks=2, max_fused_lanes=512):
    """Heads processed per attention grid step.  Chosen so the fused output width
    Hblk*head_dim is lane-dense (multiple of 128, or the full feature dim) while the
    (Hblk, head_dim) block trailer stays legal under the (8, 128) tiling rule.
    If batch/seq provide <2 parallel blocks, prefer >=2 head groups so the work can
    shard across both TensorCores on v7x."""
    def legal(hb):
        lane_ok = ((hb * head_dim) % 128 == 0) or (hb == num_heads)
        sublane_ok = (hb % 8 == 0) or (hb == num_heads)
        return (num_heads % hb == 0) and lane_ok and sublane_ok

    candidates = [hb for hb in range(1, num_heads + 1) if legal(hb)]
    fits = [hb for hb in candidates if hb * head_dim <= max_fused_lanes]
    hb = max(fits) if fits else min(candidates)
    if other_parallel_blocks < 2 and hb == num_heads:
        split = [c for c in (fits or candidates) if c < num_heads]
        if split:
            hb = max(split)   # >=2 head blocks -> megacore parallelism on v7x
    return hb


# ---------------------------------------------------------------------------
# Kernel 1: tiled dense linear layer  y = x @ W + b  (qkv and fc projections)
# ---------------------------------------------------------------------------
def _linear_kernel(x_ref, w_ref, b_ref, o_ref, acc_ref):
    @pl.when(pl.program_id(2) == 0)
    def _init():
        acc_ref[...] = jnp.zeros_like(acc_ref)

    acc_ref[...] += jnp.dot(x_ref[...], w_ref[...],
                            preferred_element_type=jnp.float32)

    @pl.when(pl.program_id(2) == pl.num_programs(2) - 1)
    def _finalize():
        o_ref[...] = (acc_ref[...] + b_ref[...].astype(jnp.float32)).astype(o_ref.dtype)


def linear(x, w, b, *, tm_pref=512, tn_pref=512, tk_pref=512):
    """x: (M, K), w: (K, N), b: (N,) -> (M, N)."""
    M, K = x.shape
    K2, N = w.shape
    assert K == K2 and b.shape == (N,)
    tm = _pick_tile(M, tm_pref, _sublane_quantum(x.dtype))
    tn = _pick_tile(N, tn_pref, 128)
    tk = _pick_tile(K, tk_pref, 128)
    grid = (M // tm, N // tn, K // tk)
    return pl.pallas_call(
        _linear_kernel,
        out_shape=jax.ShapeDtypeStruct((M, N), x.dtype),
        grid=grid,
        in_specs=[
            pl.BlockSpec((tm, tk), lambda i, j, k: (i, k)),
            pl.BlockSpec((tk, tn), lambda i, j, k: (k, j)),
            pl.BlockSpec((1, tn), lambda i, j, k: (0, j)),
        ],
        out_specs=pl.BlockSpec((tm, tn), lambda i, j, k: (i, j)),
        scratch_shapes=[pltpu.VMEM((tm, tn), jnp.float32)],
        compiler_params=pltpu.CompilerParams(
            dimension_semantics=("parallel", "parallel", "arbitrary"),
            vmem_limit_bytes=_VMEM_LIMIT,
        ),
    )(x, w, b.reshape(1, N))


# ---------------------------------------------------------------------------
# Kernel 2: flash-style multi-head attention over the packed qkv activation
#   grid = (B, H//Hblk, N//tq, N//tkv), kv is the trailing "arbitrary" axis.
# ---------------------------------------------------------------------------
def _flash_attn_kernel(q_ref, k_ref, v_ref, o_ref, q_sc, m_sc, l_sc, acc_sc, *, scale):
    # Block views:  q_ref: (tq, Hblk, hd)   k_ref/v_ref: (tkv, Hblk, hd)
    #               o_ref: (tq, Hblk*hd)
    # Scratch:      q_sc: (Hblk, tq, hd) input dtype (pre-scaled, head-major)
    #               m/l:  (Hblk, tq, 1) f32     acc: (Hblk, tq, hd) f32
    kv = pl.program_id(3)

    @pl.when(kv == 0)
    def _init():
        # Hoisted across the kv axis: head-major relayout of q with the softmax
        # scale folded in.  Removes a per-kv-step XLU transpose and shrinks the
        # scale multiply from tq*tkv to tq*hd elements done once per q block.
        q_sc[...] = (jnp.transpose(q_ref[...], (1, 0, 2)) * scale).astype(q_sc.dtype)
        m_sc[...] = jnp.full(m_sc.shape, -jnp.inf, m_sc.dtype)
        l_sc[...] = jnp.zeros_like(l_sc)
        acc_sc[...] = jnp.zeros_like(acc_sc)

    # Head-major layout for the batched MXU matmuls (in-VMEM relayout only).
    k = jnp.transpose(k_ref[...], (1, 0, 2))            # (Hblk, tkv, hd)
    v = jnp.transpose(v_ref[...], (1, 0, 2))            # (Hblk, tkv, hd)

    # (q * scale) @ k^T by contracting the last dims (no materialized k transpose).
    s = jnp.einsum("hqd,hkd->hqk", q_sc[...], k,
                   preferred_element_type=jnp.float32)   # (Hblk, tq, tkv) f32

    m_prev = m_sc[...]
    m_new = jnp.maximum(m_prev, jnp.max(s, axis=-1, keepdims=True))
    alpha = jnp.exp(m_prev - m_new)
    p = jnp.exp(s - m_new)
    l_sc[...] = alpha * l_sc[...] + jnp.sum(p, axis=-1, keepdims=True)
    acc_sc[...] = alpha * acc_sc[...] + jnp.einsum(
        "hqk,hkd->hqd", p.astype(v.dtype), v, preferred_element_type=jnp.float32)
    m_sc[...] = m_new

    @pl.when(kv == pl.num_programs(3) - 1)
    def _finalize():
        hblk, tq, hd = acc_sc.shape
        l = l_sc[...]
        inv_l = pl.reciprocal(l, approx=True)            # EUP slot, ~free
        inv_l = inv_l * (2.0 - l * inv_l)                # one Newton step -> f32-accurate
        o = acc_sc[...] * inv_l                          # (Hblk, tq, hd) f32
        # Single lane-dense (tq, Hblk*hd) store, already in the (B, N, F) layout
        # consumed by the fc projection (replaces masked per-head partial stores).
        o_ref[...] = jnp.transpose(o, (1, 0, 2)).reshape(tq, hblk * hd).astype(o_ref.dtype)


def fused_mha(qkv, scale, *, tq_pref=256, tkv_pref=512):
    """qkv: (B, N, 3, H, hd) packed projection -> (B, N, H*hd) attention output."""
    B, N, three, H, hd = qkv.shape
    assert three == 3
    tq = _pick_tile(N, tq_pref, _sublane_quantum(qkv.dtype))
    tkv = _pick_tile(N, tkv_pref, 128)
    hblk = _pick_head_block(H, hd, other_parallel_blocks=B * (N // tq))
    F = H * hd
    grid = (B, H // hblk, N // tq, N // tkv)

    q_spec = pl.BlockSpec((None, tq, None, hblk, hd),
                          lambda b, h, qi, ki: (b, qi, 0, h, 0))
    k_spec = pl.BlockSpec((None, tkv, None, hblk, hd),
                          lambda b, h, qi, ki: (b, ki, 1, h, 0))
    v_spec = pl.BlockSpec((None, tkv, None, hblk, hd),
                          lambda b, h, qi, ki: (b, ki, 2, h, 0))
    o_spec = pl.BlockSpec((None, tq, hblk * hd),
                          lambda b, h, qi, ki: (b, qi, h))

    kernel = functools.partial(_flash_attn_kernel, scale=scale)
    return pl.pallas_call(
        kernel,
        out_shape=jax.ShapeDtypeStruct((B, N, F), qkv.dtype),
        grid=grid,
        in_specs=[q_spec, k_spec, v_spec],
        out_specs=o_spec,
        scratch_shapes=[
            pltpu.VMEM((hblk, tq, hd), qkv.dtype),       # q (head-major, pre-scaled)
            pltpu.VMEM((hblk, tq, 1), jnp.float32),      # running max   m
            pltpu.VMEM((hblk, tq, 1), jnp.float32),      # running denom l
            pltpu.VMEM((hblk, tq, hd), jnp.float32),     # running numerator
        ],
        compiler_params=pltpu.CompilerParams(
            dimension_semantics=("parallel", "parallel", "parallel", "arbitrary"),
            vmem_limit_bytes=_VMEM_LIMIT,
        ),
    )(qkv, qkv, qkv)


# ---------------------------------------------------------------------------
# Module forward
# ---------------------------------------------------------------------------
def attention_forward(x, params, num_heads, compute_dtype=None):
    B, N, F = x.shape
    hd = F // num_heads
    scale = hd ** (-0.5)

    # Optional bf16 MXU fast path (v5e/v6e/v7x): cast at the pallas_call boundary;
    # accumulation and softmax statistics remain f32 inside the kernels.
    if compute_dtype is not None:
        x = x.astype(compute_dtype)
        params = {k: v.astype(compute_dtype) for k, v in params.items()}

    # qkv projection (tiled matmul kernel).
    qkv = linear(x.reshape(B * N, F), params["w_qkv"], params["b_qkv"])   # (B*N, 3F)
    # Metadata-only reshape: (B*N, 3F) -> (B, N, 3, H, hd).  The attention kernel's
    # BlockSpec index maps slice q/k/v and head groups directly from this layout,
    # so no transposed qkv copy is materialized in HBM.
    qkv = qkv.reshape(B, N, 3, num_heads, hd)

    # Flash-style multi-head attention; output already in (B, N, F) layout.
    # (Dropout p=0.0 -> identity, matching the PyTorch module default.)
    o = fused_mha(qkv, scale)

    # Output projection.
    out = linear(o.reshape(B * N, F), params["w_fc"], params["b_fc"])
    return out.reshape(B, N, F)


# ---------------------------------------------------------------------------
# Pure-JAX reference (mirrors the PyTorch forward) for correctness checking
# ---------------------------------------------------------------------------
def attention_reference(x, params, num_heads):
    B, N, F = x.shape
    hd = F // num_heads
    scale = hd ** (-0.5)
    qkv = x @ params["w_qkv"] + params["b_qkv"]
    qkv = qkv.reshape(B, N, 3, num_heads, hd).transpose(2, 0, 3, 1, 4)
    q, k, v = qkv[0], qkv[1], qkv[2]
    attn = (q @ jnp.swapaxes(k, -2, -1)) * scale
    attn = jax.nn.softmax(attn, axis=-1)
    o = (attn @ v).transpose(0, 2, 1, 3).reshape(B, N, F)
    return o @ params["w_fc"] + params["b_fc"]


def init_params(key, dim):
    k1, k2, k3, k4 = jax.random.split(key, 4)
    bound = 1.0 / (dim ** 0.5)
    return {
        "w_qkv": jax.random.uniform(k1, (dim, 3 * dim), jnp.float32, -bound, bound),
        "b_qkv": jax.random.uniform(k2, (3 * dim,), jnp.float32, -bound, bound),
        "w_fc": jax.random.uniform(k3, (dim, dim), jnp.float32, -bound, bound),
        "b_fc": jax.random.uniform(k4, (dim,), jnp.float32, -bound, bound),
    }


if __name__ == "__main__":
    B, N, DIM, HEADS = 2, 8, 64, 8   # head_dim = 8

    key = jax.random.PRNGKey(0)
    kx, kp = jax.random.split(key)
    x = jax.random.normal(kx, (B, N, DIM), dtype=jnp.float32)
    params = init_params(kp, DIM)
    ref = attention_reference(x, params, HEADS)

    # f32 path (exact reference check).
    fwd_f32 = jax.jit(functools.partial(attention_forward, num_heads=HEADS))
    out = jax.block_until_ready(fwd_f32(x, params))
    assert out.shape == (B, N, DIM)
    assert jnp.allclose(out, ref, atol=2e-3, rtol=2e-3), "f32 mismatch vs reference"

    # bf16 MXU fast path (recommended on v5e/v6e/v7x); loose tolerance for bf16 inputs.
    fwd_bf16 = jax.jit(functools.partial(attention_forward, num_heads=HEADS,
                                         compute_dtype=jnp.bfloat16))
    out_bf16 = jax.block_until_ready(fwd_bf16(x, params))
    assert out_bf16.shape == (B, N, DIM)
    assert jnp.allclose(out_bf16.astype(jnp.float32), ref, atol=1e-1, rtol=1e-1), \
        "bf16 mismatch vs reference"

    print("KERNEL_OK")
</pallas_src>

<mosaic_0001>
module attributes {stable_mosaic.version = 11 : i64} {
  func.func @_linear_kernel(%arg0: i32, %arg1: i32, %arg2: i32, %arg3: memref<16x64xf32, #tpu.memory_space<vmem>>, %arg4: memref<64x64xf32, #tpu.memory_space<vmem>>, %arg5: memref<1x64xf32, #tpu.memory_space<vmem>>, %arg6: memref<16x64xf32, #tpu.memory_space<vmem>>, %arg7: memref<16x64xf32, #tpu.memory_space<vmem>>) attributes {dimension_semantics = [#tpu.dimension_semantics<parallel>, #tpu.dimension_semantics<parallel>, #tpu.dimension_semantics<arbitrary>], iteration_bounds = array<i64: 1, 1, 1>, scalar_prefetch = 0 : i64, scratch_operands = 1 : i64, tpu.core_type = #tpu.core_type<tc>, window_params = [{transform_indices = @transform_0, window_bounds = array<i64: 16, 64>}, {transform_indices = @transform_1, window_bounds = array<i64: 64, 64>}, {transform_indices = @transform_2, window_bounds = array<i64: 1, 64>}, {transform_indices = @transform_3, window_bounds = array<i64: 16, 64>}]} {
    %c0_i32 = arith.constant 0 : i32
    %0 = arith.cmpi eq, %arg2, %c0_i32 : i32
    %1 = arith.extui %0 : i1 to i32
    %c0_i32_0 = arith.constant 0 : i32
    %2 = arith.cmpi ne, %1, %c0_i32_0 : i32
    scf.if %2 {
      %cst_10 = arith.constant 0.000000e+00 : f32
      %12 = vector.broadcast %cst_10 : f32 to vector<16x64xf32>
      %c0_11 = arith.constant 0 : index
      %c0_12 = arith.constant 0 : index
      %13 = vector.load %arg7[%c0_11, %c0_12] : memref<16x64xf32, #tpu.memory_space<vmem>>, vector<16x64xf32>
      tpu.vector_store %arg7[%c0_11, %c0_12], %12 {strides = array<i32>} : memref<16x64xf32, #tpu.memory_space<vmem>>, vector<16x64xf32>,
    } else {
    }
    %c0 = arith.constant 0 : index
    %c0_1 = arith.constant 0 : index
    %3 = vector.load %arg7[%c0, %c0_1] : memref<16x64xf32, #tpu.memory_space<vmem>>, vector<16x64xf32>
    %c0_2 = arith.constant 0 : index
    %c0_3 = arith.constant 0 : index
    %4 = vector.load %arg3[%c0_2, %c0_3] : memref<16x64xf32, #tpu.memory_space<vmem>>, vector<16x64xf32>
    %c0_4 = arith.constant 0 : index
    %c0_5 = arith.constant 0 : index
    %5 = vector.load %arg4[%c0_4, %c0_5] : memref<64x64xf32, #tpu.memory_space<vmem>>, vector<64x64xf32>
    %cst = arith.constant dense<0.000000e+00> : vector<16x64xf32>
    %6 = tpu.matmul %4, %5, %cst {dimension_numbers = #tpu.dot_dimension_numbers<[1], [0], [0], [1], [0, 0, 1, 1], [], []>} : vector<16x64xf32>, vector<64x64xf32>, vector<16x64xf32> -> vector<16x64xf32>
    %7 = arith.addf %3, %6 : vector<16x64xf32>
    %c0_6 = arith.constant 0 : index
    %c0_7 = arith.constant 0 : index
    %8 = vector.load %arg7[%c0_6, %c0_7] : memref<16x64xf32, #tpu.memory_space<vmem>>, vector<16x64xf32>
    tpu.vector_store %arg7[%c0_6, %c0_7], %7 {strides = array<i32>} : memref<16x64xf32, #tpu.memory_space<vmem>>, vector<16x64xf32>,
    %c0_i32_8 = arith.constant 0 : i32
    %9 = arith.cmpi eq, %arg2, %c0_i32_8 : i32
    %10 = arith.extui %9 : i1 to i32
    %c0_i32_9 = arith.constant 0 : i32
    %11 = arith.cmpi ne, %10, %c0_i32_9 : i32
    scf.if %11 {
      %c0_10 = arith.constant 0 : index
      %c0_11 = arith.constant 0 : index
      %12 = vector.load %arg7[%c0_10, %c0_11] : memref<16x64xf32, #tpu.memory_space<vmem>>, vector<16x64xf32>
      %c0_12 = arith.constant 0 : index
      %c0_13 = arith.constant 0 : index
      %13 = vector.load %arg5[%c0_12, %c0_13] : memref<1x64xf32, #tpu.memory_space<vmem>>, vector<1x64xf32>
      %14 = vector.broadcast %13 : vector<1x64xf32> to vector<16x64xf32>
      %15 = arith.addf %12, %14 : vector<16x64xf32>
      %c0_14 = arith.constant 0 : index
      %c0_15 = arith.constant 0 : index
      %16 = vector.load %arg6[%c0_14, %c0_15] : memref<16x64xf32, #tpu.memory_space<vmem>>, vector<16x64xf32>
      tpu.vector_store %arg6[%c0_14, %c0_15], %15 {strides = array<i32>} : memref<16x64xf32, #tpu.memory_space<vmem>>, vector<16x64xf32>,
    } else {
    }
    return
  }
  func.func @transform_0(%arg0: i32, %arg1: i32, %arg2: i32) -> (i32, i32) {
    %c0_i32 = arith.constant 0 : i32
    return %arg0, %arg2 : i32, i32
  }
  func.func @transform_1(%arg0: i32, %arg1: i32, %arg2: i32) -> (i32, i32) {
    %c0_i32 = arith.constant 0 : i32
    return %arg2, %arg1 : i32, i32
  }
  func.func @transform_2(%arg0: i32, %arg1: i32, %arg2: i32) -> (i32, i32) {
    %c0_i32 = arith.constant 0 : i32
    %c0_i32_0 = arith.constant 0 : i32
    return %c0_i32, %arg1 : i32, i32
  }
  func.func @transform_3(%arg0: i32, %arg1: i32, %arg2: i32) -> (i32, i32) {
    %c0_i32 = arith.constant 0 : i32
    return %arg0, %arg1 : i32, i32
  }
}

module attributes {stable_mosaic.version = 11 : i64} {
  func.func @_linear_kernel(%arg0: i32, %arg1: i32, %arg2: i32, %arg3: memref<16x64xf32, #tpu.memory_space<vmem>>, %arg4: memref<64x192xf32, #tpu.memory_space<vmem>>, %arg5: memref<1x192xf32, #tpu.memory_space<vmem>>, %arg6: memref<16x192xf32, #tpu.memory_space<vmem>>, %arg7: memref<16x192xf32, #tpu.memory_space<vmem>>) attributes {dimension_semantics = [#tpu.dimension_semantics<parallel>, #tpu.dimension_semantics<parallel>, #tpu.dimension_semantics<arbitrary>], iteration_bounds = array<i64: 1, 1, 1>, scalar_prefetch = 0 : i64, scratch_operands = 1 : i64, tpu.core_type = #tpu.core_type<tc>, window_params = [{transform_indices = @transform_0, window_bounds = array<i64: 16, 64>}, {transform_indices = @transform_1, window_bounds = array<i64: 64, 192>}, {transform_indices = @transform_2, window_bounds = array<i64: 1, 192>}, {transform_indices = @transform_3, window_bounds = array<i64: 16, 192>}]} {
    %c0_i32 = arith.constant 0 : i32
    %0 = arith.cmpi eq, %arg2, %c0_i32 : i32
    %1 = arith.extui %0 : i1 to i32
    %c0_i32_0 = arith.constant 0 : i32
    %2 = arith.cmpi ne, %1, %c0_i32_0 : i32
    scf.if %2 {
      %cst_10 = arith.constant 0.000000e+00 : f32
      %12 = vector.broadcast %cst_10 : f32 to vector<16x192xf32>
      %c0_11 = arith.constant 0 : index
      %c0_12 = arith.constant 0 : index
      %13 = vector.load %arg7[%c0_11, %c0_12] : memref<16x192xf32, #tpu.memory_space<vmem>>, vector<16x192xf32>
      tpu.vector_store %arg7[%c0_11, %c0_12], %12 {strides = array<i32>} : memref<16x192xf32, #tpu.memory_space<vmem>>, vector<16x192xf32>,
    } else {
    }
    %c0 = arith.constant 0 : index
    %c0_1 = arith.constant 0 : index
    %3 = vector.load %arg7[%c0, %c0_1] : memref<16x192xf32, #tpu.memory_space<vmem>>, vector<16x192xf32>
    %c0_2 = arith.constant 0 : index
    %c0_3 = arith.constant 0 : index
    %4 = vector.load %arg3[%c0_2, %c0_3] : memref<16x64xf32, #tpu.memory_space<vmem>>, vector<16x64xf32>
    %c0_4 = arith.constant 0 : index
    %c0_5 = arith.constant 0 : index
    %5 = vector.load %arg4[%c0_4, %c0_5] : memref<64x192xf32, #tpu.memory_space<vmem>>, vector<64x192xf32>
    %cst = arith.constant dense<0.000000e+00> : vector<16x192xf32>
    %6 = tpu.matmul %4, %5, %cst {dimension_numbers = #tpu.dot_dimension_numbers<[1], [0], [0], [1], [0, 0, 1, 1], [], []>} : vector<16x64xf32>, vector<64x192xf32>, vector<16x192xf32> -> vector<16x192xf32>
    %7 = arith.addf %3, %6 : vector<16x192xf32>
    %c0_6 = arith.constant 0 : index
    %c0_7 = arith.constant 0 : index
    %8 = vector.load %arg7[%c0_6, %c0_7] : memref<16x192xf32, #tpu.memory_space<vmem>>, vector<16x192xf32>
    tpu.vector_store %arg7[%c0_6, %c0_7], %7 {strides = array<i32>} : memref<16x192xf32, #tpu.memory_space<vmem>>, vector<16x192xf32>,
    %c0_i32_8 = arith.constant 0 : i32
    %9 = arith.cmpi eq, %arg2, %c0_i32_8 : i32
    %10 = arith.extui %9 : i1 to i32
    %c0_i32_9 = arith.constant 0 : i32
    %11 = arith.cmpi ne, %10, %c0_i32_9 : i32
    scf.if %11 {
      %c0_10 = arith.constant 0 : index
      %c0_11 = arith.constant 0 : index
      %12 = vector.load %arg7[%c0_10, %c0_11] : memref<16x192xf32, #tpu.memory_space<vmem>>, vector<16x192xf32>
      %c0_12 = arith.constant 0 : index
      %c0_13 = arith.constant 0 : index
      %13 = vector.load %arg5[%c0_12, %c0_13] : memref<1x192xf32, #tpu.memory_space<vmem>>, vector<1x192xf32>
      %14 = vector.broadcast %13 : vector<1x192xf32> to vector<16x192xf32>
      %15 = arith.addf %12, %14 : vector<16x192xf32>
      %c0_14 = arith.constant 0 : index
      %c0_15 = arith.constant 0 : index
      %16 = vector.load %arg6[%c0_14, %c0_15] : memref<16x192xf32, #tpu.memory_space<vmem>>, vector<16x192xf32>
      tpu.vector_store %arg6[%c0_14, %c0_15], %15 {strides = array<i32>} : memref<16x192xf32, #tpu.memory_space<vmem>>, vector<16x192xf32>,
    } else {
    }
    return
  }
  func.func @transform_0(%arg0: i32, %arg1: i32, %arg2: i32) -> (i32, i32) {
    %c0_i32 = arith.constant 0 : i32
    return %arg0, %arg2 : i32, i32
  }
  func.func @transform_1(%arg0: i32, %arg1: i32, %arg2: i32) -> (i32, i32) {
    %c0_i32 = arith.constant 0 : i32
    return %arg2, %arg1 : i32, i32
  }
  func.func @transform_2(%arg0: i32, %arg1: i32, %arg2: i32) -> (i32, i32) {
    %c0_i32 = arith.constant 0 : i32
    %c0_i32_0 = arith.constant 0 : i32
    return %c0_i32, %arg1 : i32, i32
  }
  func.func @transform_3(%arg0: i32, %arg1: i32, %arg2: i32) -> (i32, i32) {
    %c0_i32 = arith.constant 0 : i32
    return %arg0, %arg1 : i32, i32
  }
}

module attributes {stable_mosaic.version = 11 : i64} {
  func.func @_flash_attn_kernel(%arg0: i32, %arg1: i32, %arg2: i32, %arg3: i32, %arg4: memref<1x8x1x8x8xf32, #tpu.memory_space<vmem>>, %arg5: memref<1x8x1x8x8xf32, #tpu.memory_space<vmem>>, %arg6: memref<1x8x1x8x8xf32, #tpu.memory_space<vmem>>, %arg7: memref<1x8x64xf32, #tpu.memory_space<vmem>>, %arg8: memref<8x8x8xf32, #tpu.memory_space<vmem>>, %arg9: memref<8x8x1xf32, #tpu.memory_space<vmem>>, %arg10: memref<8x8x1xf32, #tpu.memory_space<vmem>>, %arg11: memref<8x8x8xf32, #tpu.memory_space<vmem>>) attributes {dimension_semantics = [#tpu.dimension_semantics<parallel>, #tpu.dimension_semantics<parallel>, #tpu.dimension_semantics<parallel>, #tpu.dimension_semantics<arbitrary>], iteration_bounds = array<i64: 2, 1, 1, 1>, scalar_prefetch = 0 : i64, scratch_operands = 4 : i64, tpu.core_type = #tpu.core_type<tc>, window_params = [{transform_indices = @transform_0, window_bounds = array<i64: 1, 8, 1, 8, 8>}, {transform_indices = @transform_1, window_bounds = array<i64: 1, 8, 1, 8, 8>}, {transform_indices = @transform_2, window_bounds = array<i64: 1, 8, 1, 8, 8>}, {transform_indices = @transform_3, window_bounds = array<i64: 1, 8, 64>}]} {
    %c0_i32 = arith.constant 0 : i32
    %0 = arith.cmpi eq, %arg3, %c0_i32 : i32
    %1 = arith.extui %0 : i1 to i32
    %c0_i32_0 = arith.constant 0 : i32
    %2 = arith.cmpi ne, %1, %c0_i32_0 : i32
    scf.if %2 {
      %c0_36 = arith.constant 0 : index
      %c0_37 = arith.constant 0 : index
      %c0_38 = arith.constant 0 : index
      %c0_39 = arith.constant 0 : index
      %c0_40 = arith.constant 0 : index
      %36 = vector.load %arg4[%c0_36, %c0_37, %c0_38, %c0_39, %c0_40] : memref<1x8x1x8x8xf32, #tpu.memory_space<vmem>>, vector<1x8x1x8x8xf32>
      %37 = vector.shape_cast %36 : vector<1x8x1x8x8xf32> to vector<8x8x8xf32>
      %38 = tpu.transpose %37, [1, 0, 2] : vector<8x8x8xf32> -> vector<8x8x8xf32>
      %cst_41 = arith.constant 0.353553385 : f32
      %39 = vector.broadcast %cst_41 : f32 to vector<8x8x8xf32>
      %40 = arith.mulf %38, %39 : vector<8x8x8xf32>
      %c0_42 = arith.constant 0 : index
      %c0_43 = arith.constant 0 : index
      %c0_44 = arith.constant 0 : index
      %41 = vector.load %arg8[%c0_42, %c0_43, %c0_44] : memref<8x8x8xf32, #tpu.memory_space<vmem>>, vector<8x8x8xf32>
      tpu.vector_store %arg8[%c0_42, %c0_43, %c0_44], %40 {strides = array<i32>} : memref<8x8x8xf32, #tpu.memory_space<vmem>>, vector<8x8x8xf32>,
      %cst_45 = arith.constant 0xFF800000 : f32
      %42 = vector.broadcast %cst_45 : f32 to vector<8x8x1xf32>
      %c0_46 = arith.constant 0 : index
      %c0_47 = arith.constant 0 : index
      %c0_48 = arith.constant 0 : index
      %43 = vector.load %arg9[%c0_46, %c0_47, %c0_48] : memref<8x8x1xf32, #tpu.memory_space<vmem>>, vector<8x8x1xf32>
      tpu.vector_store %arg9[%c0_46, %c0_47, %c0_48], %42 {strides = array<i32>} : memref<8x8x1xf32, #tpu.memory_space<vmem>>, vector<8x8x1xf32>,
      %cst_49 = arith.constant 0.000000e+00 : f32
      %44 = vector.broadcast %cst_49 : f32 to vector<8x8x1xf32>
      %c0_50 = arith.constant 0 : index
      %c0_51 = arith.constant 0 : index
      %c0_52 = arith.constant 0 : index
      %45 = vector.load %arg10[%c0_50, %c0_51, %c0_52] : memref<8x8x1xf32, #tpu.memory_space<vmem>>, vector<8x8x1xf32>
      tpu.vector_store %arg10[%c0_50, %c0_51, %c0_52], %44 {strides = array<i32>} : memref<8x8x1xf32, #tpu.memory_space<vmem>>, vector<8x8x1xf32>,
      %cst_53 = arith.constant 0.000000e+00 : f32
      %46 = vector.broadcast %cst_53 : f32 to vector<8x8x8xf32>
      %c0_54 = arith.constant 0 : index
      %c0_55 = arith.constant 0 : index
      %c0_56 = arith.constant 0 : index
      %47 = vector.load %arg11[%c0_54, %c0_55, %c0_56] : memref<8x8x8xf32, #tpu.memory_space<vmem>>, vector<8x8x8xf32>
      tpu.vector_store %arg11[%c0_54, %c0_55, %c0_56], %46 {strides = array<i32>} : memref<8x8x8xf32, #tpu.memory_space<vmem>>, vector<8x8x8xf32>,
    } else {
    }
    %c0 = arith.constant 0 : index
    %c0_1 = arith.constant 0 : index
    %c0_2 = arith.constant 0 : index
    %c0_3 = arith.constant 0 : index
    %c0_4 = arith.constant 0 : index
    %3 = vector.load %arg5[%c0, %c0_1, %c0_2, %c0_3, %c0_4] : memref<1x8x1x8x8xf32, #tpu.memory_space<vmem>>, vector<1x8x1x8x8xf32>
    %4 = vector.shape_cast %3 : vector<1x8x1x8x8xf32> to vector<8x8x8xf32>
    %5 = tpu.transpose %4, [1, 0, 2] : vector<8x8x8xf32> -> vector<8x8x8xf32>
    %c0_5 = arith.constant 0 : index
    %c0_6 = arith.constant 0 : index
    %c0_7 = arith.constant 0 : index
    %c0_8 = arith.constant 0 : index
    %c0_9 = arith.constant 0 : index
    %6 = vector.load %arg6[%c0_5, %c0_6, %c0_7, %c0_8, %c0_9] : memref<1x8x1x8x8xf32, #tpu.memory_space<vmem>>, vector<1x8x1x8x8xf32>
    %7 = vector.shape_cast %6 : vector<1x8x1x8x8xf32> to vector<8x8x8xf32>
    %8 = tpu.transpose %7, [1, 0, 2] : vector<8x8x8xf32> -> vector<8x8x8xf32>
    %c0_10 = arith.constant 0 : index
    %c0_11 = arith.constant 0 : index
    %c0_12 = arith.constant 0 : index
    %9 = vector.load %arg8[%c0_10, %c0_11, %c0_12] : memref<8x8x8xf32, #tpu.memory_space<vmem>>, vector<8x8x8xf32>
    "tpu.trace_start"() <{level = 10 : i32, message = "hqd,hkd->hqk"}> : () -> ()
    %cst = arith.constant dense<0.000000e+00> : vector<8x8x8xf32>
    %10 = tpu.matmul %9, %5, %cst {dimension_numbers = #tpu.dot_dimension_numbers<[2], [2], [1], [1], [0, 0, 0, 1, 1, 1], [0], [0]>} : vector<8x8x8xf32>, vector<8x8x8xf32>, vector<8x8x8xf32> -> vector<8x8x8xf32>
    "tpu.trace_stop"() : () -> ()
    %c0_13 = arith.constant 0 : index
    %c0_14 = arith.constant 0 : index
    %c0_15 = arith.constant 0 : index
    %11 = vector.load %arg9[%c0_13, %c0_14, %c0_15] : memref<8x8x1xf32, #tpu.memory_space<vmem>>, vector<8x8x1xf32>
    %cst_16 = arith.constant dense<0xFF800000> : vector<8x8xf32>
    %12 = vector.multi_reduction <maximumf>, %10, %cst_16 [2] : vector<8x8x8xf32> to vector<8x8xf32>
    %13 = vector.shape_cast %12 : vector<8x8xf32> to vector<8x8x1xf32>
    %14 = arith.maximumf %11, %13 : vector<8x8x1xf32>
    %15 = arith.subf %11, %14 : vector<8x8x1xf32>
    %16 = math.exp %15 : vector<8x8x1xf32>
    %17 = vector.broadcast %14 : vector<8x8x1xf32> to vector<8x8x8xf32>
    %18 = arith.subf %10, %17 : vector<8x8x8xf32>
    %19 = math.exp %18 : vector<8x8x8xf32>
    %c0_17 = arith.constant 0 : index
    %c0_18 = arith.constant 0 : index
    %c0_19 = arith.constant 0 : index
    %20 = vector.load %arg10[%c0_17, %c0_18, %c0_19] : memref<8x8x1xf32, #tpu.memory_space<vmem>>, vector<8x8x1xf32>
    %21 = arith.mulf %16, %20 : vector<8x8x1xf32>
    %cst_20 = arith.constant dense<0.000000e+00> : vector<8x8xf32>
    %22 = vector.multi_reduction <add>, %19, %cst_20 [2] : vector<8x8x8xf32> to vector<8x8xf32>
    %23 = vector.shape_cast %22 : vector<8x8xf32> to vector<8x8x1xf32>
    %24 = arith.addf %21, %23 : vector<8x8x1xf32>
    %c0_21 = arith.constant 0 : index
    %c0_22 = arith.constant 0 : index
    %c0_23 = arith.constant 0 : index
    %25 = vector.load %arg10[%c0_21, %c0_22, %c0_23] : memref<8x8x1xf32, #tpu.memory_space<vmem>>, vector<8x8x1xf32>
    tpu.vector_store %arg10[%c0_21, %c0_22, %c0_23], %24 {strides = array<i32>} : memref<8x8x1xf32, #tpu.memory_space<vmem>>, vector<8x8x1xf32>,
    %c0_24 = arith.constant 0 : index
    %c0_25 = arith.constant 0 : index
    %c0_26 = arith.constant 0 : index
    %26 = vector.load %arg11[%c0_24, %c0_25, %c0_26] : memref<8x8x8xf32, #tpu.memory_space<vmem>>, vector<8x8x8xf32>
    %27 = vector.broadcast %16 : vector<8x8x1xf32> to vector<8x8x8xf32>
    %28 = arith.mulf %27, %26 : vector<8x8x8xf32>
    "tpu.trace_start"() <{level = 10 : i32, message = "hqk,hkd->hqd"}> : () -> ()
    %cst_27 = arith.constant dense<0.000000e+00> : vector<8x8x8xf32>
    %29 = tpu.matmul %19, %8, %cst_27 {dimension_numbers = #tpu.dot_dimension_numbers<[2], [1], [1], [2], [0, 0, 0, 1, 1, 2], [0], [0]>} : vector<8x8x8xf32>, vector<8x8x8xf32>, vector<8x8x8xf32> -> vector<8x8x8xf32>
    "tpu.trace_stop"() : () -> ()
    %30 = arith.addf %28, %29 : vector<8x8x8xf32>
    %c0_28 = arith.constant 0 : index
    %c0_29 = arith.constant 0 : index
    %c0_30 = arith.constant 0 : index
    %31 = vector.load %arg11[%c0_28, %c0_29, %c0_30] : memref<8x8x8xf32, #tpu.memory_space<vmem>>, vector<8x8x8xf32>
    tpu.vector_store %arg11[%c0_28, %c0_29, %c0_30], %30 {strides = array<i32>} : memref<8x8x8xf32, #tpu.memory_space<vmem>>, vector<8x8x8xf32>,
    %c0_31 = arith.constant 0 : index
    %c0_32 = arith.constant 0 : index
    %c0_33 = arith.constant 0 : index
    %32 = vector.load %arg9[%c0_31, %c0_32, %c0_33] : memref<8x8x1xf32, #tpu.memory_space<vmem>>, vector<8x8x1xf32>
    tpu.vector_store %arg9[%c0_31, %c0_32, %c0_33], %14 {strides = array<i32>} : memref<8x8x1xf32, #tpu.memory_space<vmem>>, vector<8x8x1xf32>,
    %c0_i32_34 = arith.constant 0 : i32
    %33 = arith.cmpi eq, %arg3, %c0_i32_34 : i32
    %34 = arith.extui %33 : i1 to i32
    %c0_i32_35 = arith.constant 0 : i32
    %35 = arith.cmpi ne, %34, %c0_i32_35 : i32
    scf.if %35 {
      %c0_36 = arith.constant 0 : index
      %c0_37 = arith.constant 0 : index
      %c0_38 = arith.constant 0 : index
      %36 = vector.load %arg10[%c0_36, %c0_37, %c0_38] : memref<8x8x1xf32, #tpu.memory_space<vmem>>, vector<8x8x1xf32>
      %37 = tpu.reciprocal %36 {approx = true} : vector<8x8x1xf32> -> vector<8x8x1xf32>
      %38 = arith.mulf %36, %37 : vector<8x8x1xf32>
      %cst_39 = arith.constant 2.000000e+00 : f32
      %39 = vector.broadcast %cst_39 : f32 to vector<8x8x1xf32>
      %40 = arith.subf %39, %38 : vector<8x8x1xf32>
      %41 = arith.mulf %37, %40 : vector<8x8x1xf32>
      %c0_40 = arith.constant 0 : index
      %c0_41 = arith.constant 0 : index
      %c0_42 = arith.constant 0 : index
      %42 = vector.load %arg11[%c0_40, %c0_41, %c0_42] : memref<8x8x8xf32, #tpu.memory_space<vmem>>, vector<8x8x8xf32>
      %43 = vector.broadcast %41 : vector<8x8x1xf32> to vector<8x8x8xf32>
      %44 = arith.mulf %42, %43 : vector<8x8x8xf32>
      %45 = tpu.transpose %44, [1, 0, 2] : vector<8x8x8xf32> -> vector<8x8x8xf32>
      %46 = vector.shape_cast %45 : vector<8x8x8xf32> to vector<8x64xf32>
      %c0_43 = arith.constant 0 : index
      %c0_44 = arith.constant 0 : index
      %c0_45 = arith.constant 0 : index
      %47 = vector.load %arg7[%c0_43, %c0_44, %c0_45] : memref<1x8x64xf32, #tpu.memory_space<vmem>>, vector<1x8x64xf32>
      %48 = vector.shape_cast %47 : vector<1x8x64xf32> to vector<8x64xf32>
      %49 = vector.shape_cast %46 : vector<8x64xf32> to vector<1x8x64xf32>
      tpu.vector_store %arg7[%c0_43, %c0_44, %c0_45], %49 {strides = array<i32>} : memref<1x8x64xf32, #tpu.memory_space<vmem>>, vector<1x8x64xf32>,
    } else {
    }
    return
  }
  func.func @transform_0(%arg0: i32, %arg1: i32, %arg2: i32, %arg3: i32) -> (i32, i32, i32, i32, i32) {
    %c0_i32 = arith.constant 0 : i32
    %c0_i32_0 = arith.constant 0 : i32
    %c0_i32_1 = arith.constant 0 : i32
    return %arg0, %arg2, %c0_i32, %arg1, %c0_i32_0 : i32, i32, i32, i32, i32
  }
  func.func @transform_1(%arg0: i32, %arg1: i32, %arg2: i32, %arg3: i32) -> (i32, i32, i32, i32, i32) {
    %c1_i32 = arith.constant 1 : i32
    %c0_i32 = arith.constant 0 : i32
    %c0_i32_0 = arith.constant 0 : i32
    return %arg0, %arg3, %c1_i32, %arg1, %c0_i32 : i32, i32, i32, i32, i32
  }
  func.func @transform_2(%arg0: i32, %arg1: i32, %arg2: i32, %arg3: i32) -> (i32, i32, i32, i32, i32) {
    %c2_i32 = arith.constant 2 : i32
    %c0_i32 = arith.constant 0 : i32
    %c0_i32_0 = arith.constant 0 : i32
    return %arg0, %arg3, %c2_i32, %arg1, %c0_i32 : i32, i32, i32, i32, i32
  }
  func.func @transform_3(%arg0: i32, %arg1: i32, %arg2: i32, %arg3: i32) -> (i32, i32, i32) {
    %c0_i32 = arith.constant 0 : i32
    return %arg0, %arg2, %arg1 : i32, i32, i32
  }
}

</mosaic_0001>

<llo_original>
// kernel: attention_forward.5
$region0: #{attention_forward.5}
  #allocation0 [shape = 'u32[]', space=smem, size = 0x4, offset = 0x4, fixed_abs, tag = 'smem constant byte address 0x4 - core index']
  #allocation1 [shape = 'u32[72,128]{1,0:T(1,128)}', space=vmem, size = 0x9000, scoped, tag = 'internal scratch']
  #allocation2 [shape = 'f32[16,64]{1,0:T(8,128)}', space=vmem, size = 0x2000, scoped, tag = 'scratch operand']
  %s0 = inlined_call_operand.vmem [shape: f32[16,64], index: 0, kind: input, shape index: {}]
  %s1 = inlined_call_operand.vmem [shape: f32[64,64], index: 1, kind: input, shape index: {}]
  %s2 = inlined_call_operand.vmem [shape: f32[1,64], index: 2, kind: input, shape index: {}]
  %s3 = inlined_call_operand.hbm [shape: f32[16,64], index: 3, kind: output, shape index: {}]
  %s4 = sld [smem:[#allocation0]]
  $region30: #{attention_forward.5} parent=0
    _
  %s6 = ssub.s32 1, %s4
  %s7 = scalar_select 0, %s6, %s4
  $region1: #{attention_forward.5} parent=0
    #allocation3 [shape = 'u8[8192]{0}', space=vmem, size = 0x2000, scoped, tag = 'output window, operand 0, single buffered']
    #allocation4 [shape = 's32[1]{0}', space=sflag, size = 0x4, scoped, tag = 'scoped memory for attention_forward.5']
    %8 = vsyncpa [#allocation4], 0
    // Predicated region
    $region2: #{attention_forward.5} parent=1 // pred_check
      _
    $region3: #{attention_forward.5} parent=1 // pred_check_branch
      %10 = sbr.rel (0) target = $region5
    $region4: #{attention_forward.5} parent=1 // pred_region
      _
    $region5: #{attention_forward.5} parent=1 // pred_fallthru
      _
    // Predicated region
    $region6: #{attention_forward.5} parent=1 // pred_check
      _
    $region7: #{attention_forward.5} parent=1 // pred_check_branch
      %12 = sbr.rel (0) target = $region9
    $region8: #{attention_forward.5} parent=1 // pred_region
      _
    $region9: #{attention_forward.5} parent=1 // pred_fallthru
      _
    // Predicated region
    $region10: #{attention_forward.5} parent=1 // pred_check
      _
    $region11: #{attention_forward.5} parent=1 // pred_check_branch
      %14 = sbr.rel (0) target = $region13
    $region12: #{attention_forward.5} parent=1 // pred_region
      _
    $region13: #{attention_forward.5} parent=1 // pred_fallthru
      _
    %p15 = scmp.eq.s32.totalorder 0, 0
    // Predicated region
    $region14: #{attention_forward.5} parent=1 // pred_check
      %p16 = pneg %p15
    $region15: #{attention_forward.5} parent=1 // pred_check_branch
      %18 = sbr.rel (%p16) target = $region17
    $region16: #{attention_forward.5} parent=1 // pred_region
      %vm19 = vcmask 523264
      %20 = vst.msk [vmem:[#allocation2] sm:$0xff] %vm19, 0.0
      %21 = vst.msk [vmem:[#allocation2 + $0x8] sm:$0xff] %vm19, 0.0
    $region17: #{attention_forward.5} parent=1 // pred_fallthru
      _
    %v22 = vld [vmem:[#allocation2] sm:$0xff]
    %v23 = vld [vmem:[#allocation2 + $0x8] sm:$0xff]
    %v24 = vld [vmem:[%s0] sm:$0xff]
    %v25 = vld [vmem:[%s0 + $0x8] sm:$0xff]
    %v26 = vld [vmem:[%s1] sm:$0xff]
    %v27 = vld [vmem:[%s1 + $0x8] sm:$0xff]
    %v28 = vld [vmem:[%s1 + $0x10] sm:$0xff]
    %v29 = vld [vmem:[%s1 + $0x18] sm:$0xff]
    %v30 = vld [vmem:[%s1 + $0x20] sm:$0xff]
    %v31 = vld [vmem:[%s1 + $0x28] sm:$0xff]
    %v32 = vld [vmem:[%s1 + $0x30] sm:$0xff]
    %v33 = vld [vmem:[%s1 + $0x38] sm:$0xff]
    %vm34 = vcmask 523264
    %v36 = vsel %vm34, %v24, 0
    %v39 = vsel %vm34, %v25, 0
    %41 = vmatpush.msra.mxu0 0.0
    %42 = vmatpush.msra.mxu0 0.0
    %43 = vmatpush.msra.mxu0 0.0
    %44 = vmatpush.msra.mxu0 0.0
    %45 = vmatpush.msra.mxu0 0.0
    %46 = vmatpush.msra.mxu0 0.0
    %47 = vmatpush.msra.mxu0 0.0
    %48 = vmatpush.msra.mxu0 0.0
    %49 = vmatpush.msra.mxu0 %v33
    %50 = vmatpush.msra.mxu0 %v32
    %51 = vmatpush.msra.mxu0 %v31
    %52 = vmatpush.msra.mxu0 %v30
    %53 = vmatpush.msra.mxu0 %v29
    %54 = vmatpush.msra.mxu0 %v28
    %55 = vmatpush.msra.mxu0 %v27
    %56 = vmatpush.msra.mxu0 %v26
    %57 = vmatmul.f32.gmra.mxu0 %v36
    %v58 = vpop.f32.mrf.mxu0
    %v59 = vadd.f32 0.0, %v58
    %60 = vmatmul.f32.gmra.mxu0 %v39
    %v61 = vpop.f32.mrf.mxu0
    %v62 = vadd.f32 0.0, %v61
    %63 = vdwg.mxu0
    %v64 = vadd.f32 %v22, %v59
    %v65 = vadd.f32 %v23, %v62
    %66 = vst.msk [vmem:[#allocation2] sm:$0xff] %vm34, %v64
    %67 = vst.msk [vmem:[#allocation2 + $0x8] sm:$0xff] %vm34, %v65
    // Predicated region
    $region18: #{attention_forward.5} parent=1 // pred_check
      %p68 = pneg %p15
    $region19: #{attention_forward.5} parent=1 // pred_check_branch
      %70 = sbr.rel (%p68) target = $region21
    $region20: #{attention_forward.5} parent=1 // pred_region
      %v71 = vld [vmem:[#allocation2] sm:$0xff]
      %v72 = vld [vmem:[#allocation2 + $0x8] sm:$0xff]
      %v73 = vld [vmem:[%s2] sm:$0x1]
      %v75 = vperm.slane %v73, 0
      %v77 = vadd.f32 %v71, %v75
      %v78 = vadd.f32 %v72, %v75
      %79 = vst.msk [vmem:[#allocation3] sm:$0xff] %vm34, %v77
      %80 = vst.msk [vmem:[#allocation3 + $0x8] sm:$0xff] %vm34, %v78
    $region21: #{attention_forward.5} parent=1 // pred_fallthru
      _
    // Predicated region
    $region22: #{attention_forward.5} parent=1 // pred_check
      _
    $region23: #{attention_forward.5} parent=1 // pred_check_branch
      %82 = sbr.rel (0) target = $region25
    $region24: #{attention_forward.5} parent=1 // pred_region
      %84 = vsyncadd [#allocation4], 0
      %s85 = sshll.u32 [#allocation3], 4
      %s86 = int_to_ptr.vmem [resolvable:$true] %s85
      %s87 = sshll.u32 %s3, 4
      %s88 = int_to_ptr.hbm [resolvable:$true] %s87
      %93 = dma.vmem_to_hbm [thread:$0]  %s86, 256, %s88, [#allocation4], 128, 128, 8
    $region25: #{attention_forward.5} parent=1 // pred_fallthru
      _
    // Predicated region
    $region26: #{attention_forward.5} parent=1 // pred_check
      _
    $region27: #{attention_forward.5} parent=1 // pred_check_branch
      %95 = sbr.rel (0) target = $region29
    $region28: #{attention_forward.5} parent=1 // pred_region
      %97 = dma.done [#allocation4], 256
    $region29: #{attention_forward.5} parent=1 // pred_fallthru
      _
    %98 = vsyncpa [#allocation4], 1

// kernel: attention_forward.3
$region0: #{attention_forward.3}
  #allocation0 [shape = 'u32[]', space=smem, size = 0x4, offset = 0x4, fixed_abs, tag = 'smem constant byte address 0x4 - core index']
  #allocation1 [shape = 'u32[72,128]{1,0:T(1,128)}', space=vmem, size = 0x9000, scoped, tag = 'internal scratch']
  #allocation2 [shape = 'f32[16,192]{1,0:T(8,128)}', space=vmem, size = 0x4000, scoped, tag = 'scratch operand']
  %s0 = inlined_call_operand.hbm [shape: f32[16,64], index: 0, kind: input, shape index: {}]
  %s1 = inlined_call_operand.hbm [shape: f32[64,192], index: 1, kind: input, shape index: {}]
  %s2 = inlined_call_operand.vmem [shape: f32[1,192], index: 2, kind: input, shape index: {}]
  %s3 = inlined_call_operand.vmem [shape: f32[16,192], index: 3, kind: output, shape index: {}]
  %s4 = sld [smem:[#allocation0]]
  $region38: #{attention_forward.3} parent=0
    _
  %s6 = ssub.s32 1, %s4
  %s7 = scalar_select 0, %s6, %s4
  $region1: #{attention_forward.3} parent=0
    #allocation3 [shape = 'u8[8192]{0}', space=vmem, size = 0x2000, scoped, tag = 'input window, operand 0, single buffered']
    #allocation4 [shape = 's32[1]{0}', space=sflag, size = 0x4, scoped, tag = 'scoped memory for attention_forward.3']
    #allocation5 [shape = 'u8[65536]{0}', space=vmem, size = 0x10000, scoped, tag = 'input window, operand 1, single buffered']
    #allocation6 [shape = 's32[1]{0}', space=sflag, size = 0x4, scoped, tag = 'scoped memory for attention_forward.3']
    %8 = vsyncpa [#allocation4], 0
    %9 = vsyncpa [#allocation6], 0
    // Predicated region
    $region2: #{attention_forward.3} parent=1 // pred_check
      _
    $region3: #{attention_forward.3} parent=1 // pred_check_branch
      %11 = sbr.rel (0) target = $region5
    $region4: #{attention_forward.3} parent=1 // pred_region
      %13 = vsyncadd [#allocation4], 0
      %s14 = sshll.u32 %s0, 4
      %s15 = int_to_ptr.hbm [resolvable:$true] %s14
      %s16 = sshll.u32 [#allocation3], 4
      %s17 = int_to_ptr.vmem [resolvable:$true] %s16
      %22 = dma.hbm_to_vmem [thread:$0]  %s15, 256, %s17, [#allocation4], 128, 128, 8
    $region5: #{attention_forward.3} parent=1 // pred_fallthru
      _
    // Predicated region
    $region6: #{attention_forward.3} parent=1 // pred_check
      _
    $region7: #{attention_forward.3} parent=1 // pred_check_branch
      %24 = sbr.rel (0) target = $region9
    $region8: #{attention_forward.3} parent=1 // pred_region
      %26 = vsyncadd [#allocation6], 0
      %s27 = sshll.u32 %s1, 4
      %s28 = int_to_ptr.hbm [resolvable:$true] %s27
      %s29 = sshll.u32 [#allocation5], 4
      %s30 = int_to_ptr.vmem [resolvable:$true] %s29
      %35 = dma.hbm_to_vmem [thread:$0]  %s28, 2048, %s30, [#allocation6], 256, 256, 16
    $region9: #{attention_forward.3} parent=1 // pred_fallthru
      _
    // Predicated region
    $region10: #{attention_forward.3} parent=1 // pred_check
      _
    $region11: #{attention_forward.3} parent=1 // pred_check_branch
      %37 = sbr.rel (0) target = $region13
    $region12: #{attention_forward.3} parent=1 // pred_region
      _
    $region13: #{attention_forward.3} parent=1 // pred_fallthru
      _
    // Predicated region
    $region14: #{attention_forward.3} parent=1 // pred_check
      _
    $region15: #{attention_forward.3} parent=1 // pred_check_branch
      %39 = sbr.rel (0) target = $region17
    $region16: #{attention_forward.3} parent=1 // pred_region
      %41 = dma.done [#allocation4], 256
    $region17: #{attention_forward.3} parent=1 // pred_fallthru
      _
    // Predicated region
    $region18: #{attention_forward.3} parent=1 // pred_check
      _
    $region19: #{attention_forward.3} parent=1 // pred_check_branch
      %43 = sbr.rel (0) target = $region21
    $region20: #{attention_forward.3} parent=1 // pred_region
      %45 = dma.done [#allocation6], 2048
    $region21: #{attention_forward.3} parent=1 // pred_fallthru
      _
    %p46 = scmp.eq.s32.totalorder 0, 0
    // Predicated region
    $region22: #{attention_forward.3} parent=1 // pred_check
      %p47 = pneg %p46
    $region23: #{attention_forward.3} parent=1 // pred_check_branch
      %49 = sbr.rel (%p47) target = $region25
    $region24: #{attention_forward.3} parent=1 // pred_region
      %50 = vst [vmem:[#allocation2] sm:$0xff] 0.0
      %vm51 = vcmask 523264
      %52 = vst.msk [vmem:[#allocation2 + $0x8] sm:$0xff] %vm51, 0.0
      %53 = vst [vmem:[#allocation2 + $0x10] sm:$0xff] 0.0
      %54 = vst.msk [vmem:[#allocation2 + $0x18] sm:$0xff] %vm51, 0.0
    $region25: #{attention_forward.3} parent=1 // pred_fallthru
      _
    %v55 = vld [vmem:[#allocation2] sm:$0xff]
    %v56 = vld [vmem:[#allocation2 + $0x8] sm:$0xff]
    %v57 = vld [vmem:[#allocation2 + $0x10] sm:$0xff]
    %v58 = vld [vmem:[#allocation2 + $0x18] sm:$0xff]
    %v59 = vld [vmem:[#allocation3] sm:$0xff]
    %v60 = vld [vmem:[#allocation3 + $0x8] sm:$0xff]
    %v61 = vld [vmem:[#allocation5] sm:$0xff]
    %v62 = vld [vmem:[#allocation5 + $0x8] sm:$0xff]
    %v63 = vld [vmem:[#allocation5 + $0x10] sm:$0xff]
    %v64 = vld [vmem:[#allocation5 + $0x18] sm:$0xff]
    %v65 = vld [vmem:[#allocation5 + $0x20] sm:$0xff]
    %v66 = vld [vmem:[#allocation5 + $0x28] sm:$0xff]
    %v67 = vld [vmem:[#allocation5 + $0x30] sm:$0xff]
    %v68 = vld [vmem:[#allocation5 + $0x38] sm:$0xff]
    %v69 = vld [vmem:[#allocation5 + $0x40] sm:$0xff]
    %v70 = vld [vmem:[#allocation5 + $0x48] sm:$0xff]
    %v71 = vld [vmem:[#allocation5 + $0x50] sm:$0xff]
    %v72 = vld [vmem:[#allocation5 + $0x58] sm:$0xff]
    %v73 = vld [vmem:[#allocation5 + $0x60] sm:$0xff]
    %v74 = vld [vmem:[#allocation5 + $0x68] sm:$0xff]
    %v75 = vld [vmem:[#allocation5 + $0x70] sm:$0xff]
    %v76 = vld [vmem:[#allocation5 + $0x78] sm:$0xff]
    %vm77 = vcmask 523264
    %v79 = vsel %vm77, %v59, 0
    %v82 = vsel %vm77, %v60, 0
    %84 = vmatpush.msra.mxu0 0.0
    %85 = vmatpush.msra.mxu0 0.0
    %86 = vmatpush.msra.mxu0 0.0
    %87 = vmatpush.msra.mxu0 0.0
    %88 = vmatpush.msra.mxu0 0.0
    %89 = vmatpush.msra.mxu0 0.0
    %90 = vmatpush.msra.mxu0 0.0
    %91 = vmatpush.msra.mxu0 0.0
    %92 = vmatpush.msra.mxu0 %v75
    %93 = vmatpush.msra.mxu0 %v73
    %94 = vmatpush.msra.mxu0 %v71
    %95 = vmatpush.msra.mxu0 %v69
    %96 = vmatpush.msra.mxu0 %v67
    %97 = vmatpush.msra.mxu0 %v65
    %98 = vmatpush.msra.mxu0 %v63
    %99 = vmatpush.msra.mxu0 %v61
    %100 = vmatmul.f32.gmra.mxu0 %v79
    %v101 = vpop.f32.mrf.mxu0
    %v102 = vadd.f32 0.0, %v101
    %103 = vmatmul.f32.gmra.mxu0 %v82
    %v104 = vpop.f32.mrf.mxu0
    %v105 = vadd.f32 0.0, %v104
    %106 = vdwg.mxu0
    %107 = vmatpush.msra.mxu0 0.0
    %108 = vmatpush.msra.mxu0 0.0
    %109 = vmatpush.msra.mxu0 0.0
    %110 = vmatpush.msra.mxu0 0.0
    %111 = vmatpush.msra.mxu0 0.0
    %112 = vmatpush.msra.mxu0 0.0
    %113 = vmatpush.msra.mxu0 0.0
    %114 = vmatpush.msra.mxu0 0.0
    %115 = vmatpush.msra.mxu0 %v76
    %116 = vmatpush.msra.mxu0 %v74
    %117 = vmatpush.msra.mxu0 %v72
    %118 = vmatpush.msra.mxu0 %v70
    %119 = vmatpush.msra.mxu0 %v68
    %120 = vmatpush.msra.mxu0 %v66
    %121 = vmatpush.msra.mxu0 %v64
    %122 = vmatpush.msra.mxu0 %v62
    %123 = vmatmul.f32.gmra.mxu0 %v79
    %v124 = vpop.f32.mrf.mxu0
    %v125 = vadd.f32 0.0, %v124
    %126 = vmatmul.f32.gmra.mxu0 %v82
    %v127 = vpop.f32.mrf.mxu0
    %v128 = vadd.f32 0.0, %v127
    %129 = vdwg.mxu0
    %v130 = vadd.f32 %v55, %v102
    %v131 = vadd.f32 %v56, %v125
    %v132 = vadd.f32 %v57, %v105
    %v133 = vadd.f32 %v58, %v128
    %134 = vst [vmem:[#allocation2] sm:$0xff] %v130
    %135 = vst.msk [vmem:[#allocation2 + $0x8] sm:$0xff] %vm77, %v131
    %136 = vst [vmem:[#allocation2 + $0x10] sm:$0xff] %v132
    %137 = vst.msk [vmem:[#allocation2 + $0x18] sm:$0xff] %vm77, %v133
    // Predicated region
    $region26: #{attention_forward.3} parent=1 // pred_check
      %p138 = pneg %p46
    $region27: #{attention_forward.3} parent=1 // pred_check_branch
      %140 = sbr.rel (%p138) target = $region29
    $region28: #{attention_forward.3} parent=1 // pred_region
      %v141 = vld [vmem:[#allocation2] sm:$0xff]
      %v142 = vld [vmem:[#allocation2 + $0x8] sm:$0xff]
      %v143 = vld [vmem:[#allocation2 + $0x10] sm:$0xff]
      %v144 = vld [vmem:[#allocation2 + $0x18] sm:$0xff]
      %v145 = vld [vmem:[%s2] sm:$0x3]
      %v147 = vperm.slane %v145, 0
      %v148 = vperm.slane %v145, 1
      %v151 = vadd.f32 %v141, %v147
      %v152 = vadd.f32 %v142, %v148
      %v153 = vadd.f32 %v143, %v147
      %v154 = vadd.f32 %v144, %v148
      %155 = vst [vmem:[%s3] sm:$0xff] %v151
      %156 = vst.msk [vmem:[%s3 + $0x8] sm:$0xff] %vm77, %v152
      %157 = vst [vmem:[%s3 + $0x10] sm:$0xff] %v153
      %158 = vst.msk [vmem:[%s3 + $0x18] sm:$0xff] %vm77, %v154
    $region29: #{attention_forward.3} parent=1 // pred_fallthru
      _
    // Predicated region
    $region30: #{attention_forward.3} parent=1 // pred_check
      _
    $region31: #{attention_forward.3} parent=1 // pred_check_branch
      %160 = sbr.rel (0) target = $region33
    $region32: #{attention_forward.3} parent=1 // pred_region
      _
    $region33: #{attention_forward.3} parent=1 // pred_fallthru
      _
    // Predicated region
    $region34: #{attention_forward.3} parent=1 // pred_check
      _
    $region35: #{attention_forward.3} parent=1 // pred_check_branch
      %162 = sbr.rel (0) target = $region37
    $region36: #{attention_forward.3} parent=1 // pred_region
      _
    $region37: #{attention_forward.3} parent=1 // pred_fallthru
      _
    %163 = vsyncpa [#allocation4], 1
    %164 = vsyncpa [#allocation6], 1

// kernel: attention_forward.4
$region0: #{attention_forward.4}
  #allocation0 [shape = 'u32[]', space=smem, size = 0x4, offset = 0x4, fixed_abs, tag = 'smem constant byte address 0x4 - core index']
  #allocation1 [shape = 'u32[72,128]{1,0:T(1,128)}', space=vmem, size = 0x9000, scoped, tag = 'internal scratch']
  #allocation2 [shape = 'f32[8,8,8]{2,1,0:T(8,128)}', space=vmem, size = 0x8000, scoped, tag = 'scratch operand']
  #allocation3 [shape = 'f32[8,8,1]{2,1,0:T(8,128)}', space=vmem, size = 0x8000, scoped, tag = 'scratch operand']
  #allocation4 [shape = 'f32[8,8,1]{2,1,0:T(8,128)}', space=vmem, size = 0x8000, scoped, tag = 'scratch operand']
  #allocation5 [shape = 'f32[8,8,8]{2,1,0:T(8,128)}', space=vmem, size = 0x8000, scoped, tag = 'scratch operand']
  %s0 = inlined_call_operand.vmem [shape: f32[2,8,3,8,8], index: 0, kind: input, shape index: {}, may-alias: {0,1,2}]
  %s1 = inlined_call_operand.vmem [shape: f32[2,8,3,8,8], index: 1, kind: input, shape index: {}, may-alias: {0,1,2}]
  %s2 = inlined_call_operand.vmem [shape: f32[2,8,3,8,8], index: 2, kind: input, shape index: {}, may-alias: {0,1,2}]
  %s3 = inlined_call_operand.vmem [shape: f32[2,8,64], index: 3, kind: output, shape index: {}]
  %s4 = sld [smem:[#allocation0]]
  $region167: #{attention_forward.4} parent=0
    _
  %s6 = ssub.s32 1, %s4
  %s7 = scalar_select 0, %s6, %s4
  $region1: #{attention_forward.4} parent=0
    #allocation6 [shape = 'u8[65536]{0}', space=vmem, size = 0x10000, scoped, tag = 'input window, operand 0']
    #allocation7 [shape = 'u8[65536]{0}', space=vmem, size = 0x10000, scoped, tag = 'input window, operand 1']
    #allocation8 [shape = 'u8[65536]{0}', space=vmem, size = 0x10000, scoped, tag = 'input window, operand 2']
    loop: start=0, step=1, limit=4
    $region2: #{attention_forward.4} parent=1 // loop_pre_header
      _
    $region3: #{attention_forward.4} parent=1 // loop_header
      %s9 = sphi 0, %s13
      %p10 = scmp.ge.s32.totalorder %s9, 4
      %s16 = sphi 0, %s42
      %s17 = sphi 0, %s38
      %s18 = sphi 0, %s34
      %s19 = sphi 0, %s30
      %s20 = sphi 0, %s16
      %s21 = sphi 0, %s17
      %s22 = sphi 0, %s18
      %s23 = sphi 0, %s19
      %s24 = sphi 0, %s20
      %s25 = sphi 0, %s21
      %s26 = sphi 0, %s22
      %s27 = sphi 0, %s23
      %s49 = sphi 0, %s51
      %s52 = sphi 0, %s49
      %s53 = sphi 0, %s52
      %s69 = sphi 0, %s53
      %s79 = sphi 0, %s81
      %s82 = sphi 0, %s79
      %s83 = sphi 0, %s82
      %s99 = sphi 0, %s83
      %s109 = sphi 0, %s111
      %s112 = sphi 0, %s109
      %s113 = sphi 0, %s112
      %s129 = sphi 0, %s113
      %s139 = sphi 0, %s141
      %s142 = sphi 0, %s139
      %s143 = sphi 0, %s142
      %s159 = sphi 0, %s143
    $region4: #{attention_forward.4} parent=1 // loop_header_branch
      %12 = sbr.rel (%p10) target = $region8
    $region5: #{attention_forward.4} parent=1 // loop_body
      %s14 = ssub.s32 %s9, 1
      %s15 = ssub.s32 %s9, 2
      %s28 = sadd.s32 1, %s19
      %p29 = scmp.ge.s32.totalorder %s28, 1
      %s30 = scalar_select %p29, 0, %s28
      %s31 = sadd.s32 1, %s18
      %s32 = scalar_select %p29, %s31, %s18
      %p33 = scmp.ge.s32.totalorder %s32, 1
      %s34 = scalar_select %p33, 0, %s32
      %s35 = sadd.s32 1, %s17
      %s36 = scalar_select %p33, %s35, %s17
      %p37 = scmp.ge.s32.totalorder %s36, 1
      %s38 = scalar_select %p37, 0, %s36
      %s39 = sadd.s32 1, %s16
      %s40 = scalar_select %p37, %s39, %s16
      %p41 = scmp.ge.s32.totalorder %s40, 2
      %s42 = scalar_select %p41, 0, %s40
      %s43 = ssub.s32 %s16, %s42
      %s44 = ssub.s32 %s18, %s34
      %s45 = sor.u32 %s43, %s44
      %s46 = ssub.s32 %s17, %s38
      %s47 = sor.u32 %s45, %s46
      %p48 = scmp.eq.s32.totalorder %s47, 0
      %s50 = sadd.s32 %s49, 1
      %s51 = scalar_select %p48, %s49, %s50
      %p54 = pneg %p48
      %p55 = scmp.eq.s32.totalorder %s9, 1
      %p56 = por %p54, %p55
      %p57 = scmp.ne.s32.totalorder %s49, %s52
      %p58 = scmp.eq.s32.totalorder %s9, 0
      %p59 = por %p57, %p58
      %p60 = scmp.ne.s32.totalorder %s49, %s52
      %p61 = scmp.eq.s32.totalorder %s14, 1
      %p62 = por %p60, %p61
      %p63 = scmp.ne.s32.totalorder %s52, %s53
      %p64 = scmp.eq.s32.totalorder %s14, 0
      %p65 = por %p63, %p64
      %p66 = scmp.ne.s32.totalorder %s52, %s53
      %p67 = scmp.eq.s32.totalorder %s15, 1
      %p68 = por %p66, %p67
      %p70 = scmp.ne.s32.totalorder %s53, %s69
      %p71 = scmp.eq.s32.totalorder %s15, 0
      %p72 = por %p70, %p71
      %s73 = ssub.s32 %s16, %s42
      %s74 = ssub.s32 %s19, %s30
      %s75 = sor.u32 %s73, %s74
      %s76 = ssub.s32 %s17, %s38
      %s77 = sor.u32 %s75, %s76
      %p78 = scmp.eq.s32.totalorder %s77, 0
      %s80 = sadd.s32 %s79, 1
      %s81 = scalar_select %p78, %s79, %s80
      %p84 = pneg %p78
      %p85 = scmp.eq.s32.totalorder %s9, 1
      %p86 = por %p84, %p85
      %p87 = scmp.ne.s32.totalorder %s79, %s82
      %p88 = scmp.eq.s32.totalorder %s9, 0
      %p89 = por %p87, %p88
      %p90 = scmp.ne.s32.totalorder %s79, %s82
      %p91 = scmp.eq.s32.totalorder %s14, 1
      %p92 = por %p90, %p91
      %p93 = scmp.ne.s32.totalorder %s82, %s83
      %p94 = scmp.eq.s32.totalorder %s14, 0
      %p95 = por %p93, %p94
      %p96 = scmp.ne.s32.totalorder %s82, %s83
      %p97 = scmp.eq.s32.totalorder %s15, 1
      %p98 = por %p96, %p97
      %p100 = scmp.ne.s32.totalorder %s83, %s99
      %p101 = scmp.eq.s32.totalorder %s15, 0
      %p102 = por %p100, %p101
      %s103 = ssub.s32 %s16, %s42
      %s104 = ssub.s32 %s19, %s30
      %s105 = sor.u32 %s103, %s104
      %s106 = ssub.s32 %s17, %s38
      %s107 = sor.u32 %s105, %s106
      %p108 = scmp.eq.s32.totalorder %s107, 0
      %s110 = sadd.s32 %s109, 1
      %s111 = scalar_select %p108, %s109, %s110
      %p114 = pneg %p108
      %p115 = scmp.eq.s32.totalorder %s9, 1
      %p116 = por %p114, %p115
      %p117 = scmp.ne.s32.totalorder %s109, %s112
      %p118 = scmp.eq.s32.totalorder %s9, 0
      %p119 = por %p117, %p118
      %p120 = scmp.ne.s32.totalorder %s109, %s112
      %p121 = scmp.eq.s32.totalorder %s14, 1
      %p122 = por %p120, %p121
      %p123 = scmp.ne.s32.totalorder %s112, %s113
      %p124 = scmp.eq.s32.totalorder %s14, 0
      %p125 = por %p123, %p124
      %p126 = scmp.ne.s32.totalorder %s112, %s113
      %p127 = scmp.eq.s32.totalorder %s15, 1
      %p128 = por %p126, %p127
      %p130 = scmp.ne.s32.totalorder %s113, %s129
      %p131 = scmp.eq.s32.totalorder %s15, 0
      %p132 = por %p130, %p131
      %s133 = ssub.s32 %s16, %s42
      %s134 = ssub.s32 %s18, %s34
      %s135 = sor.u32 %s133, %s134
      %s136 = ssub.s32 %s17, %s38
      %s137 = sor.u32 %s135, %s136
      %p138 = scmp.eq.s32.totalorder %s137, 0
      %s140 = sadd.s32 %s139, 1
      %s141 = scalar_select %p138, %s139, %s140
      %p144 = pneg %p138
      %p145 = scmp.eq.s32.totalorder %s9, 1
      %p146 = por %p144, %p145
      %p147 = scmp.ne.s32.totalorder %s139, %s142
      %p148 = scmp.eq.s32.totalorder %s9, 0
      %p149 = por %p147, %p148
      %p150 = scmp.ne.s32.totalorder %s139, %s142
      %p151 = scmp.eq.s32.totalorder %s14, 1
      %p152 = por %p150, %p151
      %p153 = scmp.ne.s32.totalorder %s142, %s143
      %p154 = scmp.eq.s32.totalorder %s14, 0
      %p155 = por %p153, %p154
      %p156 = scmp.ne.s32.totalorder %s142, %s143
      %p157 = scmp.eq.s32.totalorder %s15, 1
      %p158 = por %p156, %p157
      %p160 = scmp.ne.s32.totalorder %s143, %s159
      %p161 = scmp.eq.s32.totalorder %s15, 0
      %p162 = por %p160, %p161
      %p163 = scmp.le.s32.totalorder 1, %s9
      %p164 = scmp.lt.s32.totalorder %s9, 3
      %p165 = pnand %p163, %p164
      %p166 = pneg %p165
      // Predicated region
      $region9: #{attention_forward.4} parent=5 // pred_check
        _
      $region10: #{attention_forward.4} parent=5 // pred_check_branch
        %168 = sbr.rel (%p165) target = $region12
      $region11: #{attention_forward.4} parent=5 // pred_region
        %s169 = ssub.s32 %s9, 1
      $region12: #{attention_forward.4} parent=5 // pred_fallthru
        _
      %p170 = scmp.lt.s32.totalorder %s9, 2
      // Predicated region
      $region13: #{attention_forward.4} parent=5 // pred_check
        %p171 = pneg %p170
      $region14: #{attention_forward.4} parent=5 // pred_check_branch
        %173 = sbr.rel (%p171) target = $region16
      $region15: #{attention_forward.4} parent=5 // pred_region
        // Predicated region
        $region17: #{attention_forward.4} parent=15 // pred_check
          %p174 = pneg %p59
        $region18: #{attention_forward.4} parent=15 // pred_check_branch
          %176 = sbr.rel (%p174) target = $region20
        $region19: #{attention_forward.4} parent=15 // pred_region
          %s177 = sand.u32 %s49, 1
          %s178 = sand.u32 %s49, 1
          %s179 = smul.addr %s178, 64
          %s180 = scalar_lea.vmem [#allocation6], %s179
          %s181 = smul.u32 8, %s18
          %s182 = smul.addr %s181, 3
          %s183 = sadd.s32 %s17, %s182
          %s184 = smul.addr %s16, 24
          %s185 = sadd.s32 %s183, %s184
          %s186 = smul.addr %s185, 8
          %s187 = scalar_lea.vmem %s0, %s186
          // Predicated region
          $region21: #{attention_forward.4} parent=19 // pred_check
            _
          $region22: #{attention_forward.4} parent=19 // pred_check_branch
            %189 = sbr.rel (0) target = $region24
          $region23: #{attention_forward.4} parent=19 // pred_region
            // Predicated region
            $region25: #{attention_forward.4} parent=23 // pred_check
              _
            $region26: #{attention_forward.4} parent=23 // pred_check_branch
              %191 = sbr.rel (0) target = $region28
            $region27: #{attention_forward.4} parent=23 // pred_region
              // Predicated region
              $region40: #{attention_forward.4} parent=27 // pred_check
                _
              $region41: #{attention_forward.4} parent=27 // pred_check_branch
                %221 = sbr.rel (0) target = $region43
              $region42: #{attention_forward.4} parent=27 // pred_region
                loop: start=0, step=1, limit=1
                $region44: #{attention_forward.4} parent=42 // loop_pre_header
                  _
                $region45: #{attention_forward.4} parent=42 // loop_header
                  %s223 = sphi 0, %s227
                  %p224 = scmp.ge.s32.totalorder %s223, 1
                  %s228 = sphi %s187, %s187
                  %s229 = sphi %s180, %s180
                $region46: #{attention_forward.4} parent=42 // loop_header_branch
                  %226 = sbr.rel (%p224) target = $region50
                $region47: #{attention_forward.4} parent=42 // loop_body
                  %v230 = vld [vmem:[%s228] sm:$0xff]
                  %231 = vst [vmem:[%s229] sm:$0xff] %v230
                  %v232 = vld [vmem:[%s228 + $0x18] sm:$0xff]
                  %233 = vst [vmem:[%s229 + $0x8] sm:$0xff] %v232
                  %v234 = vld [vmem:[%s228 + $0x30] sm:$0xff]
                  %235 = vst [vmem:[%s229 + $0x10] sm:$0xff] %v234
                  %v236 = vld [vmem:[%s228 + $0x48] sm:$0xff]
                  %237 = vst [vmem:[%s229 + $0x18] sm:$0xff] %v236
                  %v238 = vld [vmem:[%s228 + $0x60] sm:$0xff]
                  %239 = vst [vmem:[%s229 + $0x20] sm:$0xff] %v238
                  %v240 = vld [vmem:[%s228 + $0x78] sm:$0xff]
                  %241 = vst [vmem:[%s229 + $0x28] sm:$0xff] %v240
                  %v242 = vld [vmem:[%s228 + $0x90] sm:$0xff]
                  %243 = vst [vmem:[%s229 + $0x30] sm:$0xff] %v242
                  %v244 = vld [vmem:[%s228 + $0xa8] sm:$0xff]
                  %245 = vst [vmem:[%s229 + $0x38] sm:$0xff] %v244
                $region48: #{attention_forward.4} parent=42 // loop_footer
                  %s227 = sadd.s32 1, %s223
                $region49: #{attention_forward.4} parent=42 // loop_footer_branch
                  %222 = sbr.rel target = $region45
                $region50: #{attention_forward.4} parent=42 // loop_exit
                  _
              $region43: #{attention_forward.4} parent=27 // pred_fallthru
                _
              // Predicated region
              $region51: #{attention_forward.4} parent=27 // pred_check
                _
              $region52: #{attention_forward.4} parent=27 // pred_check_branch
                %247 = sbr.rel target = $region54
              $region53: #{attention_forward.4} parent=27 // pred_region
                _
              $region54: #{attention_forward.4} parent=27 // pred_fallthru
                _
            $region28: #{attention_forward.4} parent=23 // pred_fallthru
              _
            // Predicated region
            $region29: #{attention_forward.4} parent=23 // pred_check
              _
            $region30: #{attention_forward.4} parent=23 // pred_check_branch
              %193 = sbr.rel target = $region32
            $region31: #{attention_forward.4} parent=23 // pred_region
              %s195 = ssub.s32 256, 1
              loop: start=0, step=1, limit=1
              $region33: #{attention_forward.4} parent=31 // loop_pre_header
                _
              $region34: #{attention_forward.4} parent=31 // loop_header
                %s197 = sphi 0, %s201
                %p198 = scmp.ge.s32.totalorder %s197, 1
                %s202 = sphi %s187, %s187
                %s203 = sphi %s180, %s180
              $region35: #{attention_forward.4} parent=31 // loop_header_branch
                %200 = sbr.rel (%p198) target = $region39
              $region36: #{attention_forward.4} parent=31 // loop_body
                %v204 = vld [vmem:[%s202] sm:%s195]
                %205 = vst [vmem:[%s203] sm:%s195] %v204
                %v206 = vld [vmem:[%s202 + $0x18] sm:%s195]
                %207 = vst [vmem:[%s203 + $0x8] sm:%s195] %v206
                %v208 = vld [vmem:[%s202 + $0x30] sm:%s195]
                %209 = vst [vmem:[%s203 + $0x10] sm:%s195] %v208
                %v210 = vld [vmem:[%s202 + $0x48] sm:%s195]
                %211 = vst [vmem:[%s203 + $0x18] sm:%s195] %v210
                %v212 = vld [vmem:[%s202 + $0x60] sm:%s195]
                %213 = vst [vmem:[%s203 + $0x20] sm:%s195] %v212
                %v214 = vld [vmem:[%s202 + $0x78] sm:%s195]
                %215 = vst [vmem:[%s203 + $0x28] sm:%s195] %v214
                %v216 = vld [vmem:[%s202 + $0x90] sm:%s195]
                %217 = vst [vmem:[%s203 + $0x30] sm:%s195] %v216
                %v218 = vld [vmem:[%s202 + $0xa8] sm:%s195]
                %219 = vst [vmem:[%s203 + $0x38] sm:%s195] %v218
              $region37: #{attention_forward.4} parent=31 // loop_footer
                %s201 = sadd.s32 1, %s197
              $region38: #{attention_forward.4} parent=31 // loop_footer_branch
                %196 = sbr.rel target = $region34
              $region39: #{attention_forward.4} parent=31 // loop_exit
                _
            $region32: #{attention_forward.4} parent=23 // pred_fallthru
              _
          $region24: #{attention_forward.4} parent=19 // pred_fallthru
            _
          %248 = vnop
        $region20: #{attention_forward.4} parent=15 // pred_fallthru
          _
        // Predicated region
        $region55: #{attention_forward.4} parent=15 // pred_check
          %p249 = pneg %p89
        $region56: #{attention_forward.4} parent=15 // pred_check_branch
          %251 = sbr.rel (%p249) target = $region58
        $region57: #{attention_forward.4} parent=15 // pred_region
          %s252 = sand.u32 %s79, 1
          %s253 = sand.u32 %s79, 1
          %s254 = smul.addr %s253, 64
          %s255 = scalar_lea.vmem [#allocation7], %s254
          %s256 = smul.u32 8, %s19
          %s257 = sadd.s32 %s17, 1
          %s258 = smul.addr %s256, 3
          %s259 = sadd.s32 %s257, %s258
          %s260 = smul.addr %s16, 24
          %s261 = sadd.s32 %s259, %s260
          %s262 = smul.addr %s261, 8
          %s263 = scalar_lea.vmem %s1, %s262
          // Predicated region
          $region59: #{attention_forward.4} parent=57 // pred_check
            _
          $region60: #{attention_forward.4} parent=57 // pred_check_branch
            %265 = sbr.rel (0) target = $region62
          $region61: #{attention_forward.4} parent=57 // pred_region
            // Predicated region
            $region63: #{attention_forward.4} parent=61 // pred_check
              _
            $region64: #{attention_forward.4} parent=61 // pred_check_branch
              %267 = sbr.rel (0) target = $region66
            $region65: #{attention_forward.4} parent=61 // pred_region
              // Predicated region
              $region78: #{attention_forward.4} parent=65 // pred_check
                _
              $region79: #{attention_forward.4} parent=65 // pred_check_branch
                %297 = sbr.rel (0) target = $region81
              $region80: #{attention_forward.4} parent=65 // pred_region
                loop: start=0, step=1, limit=1
                $region82: #{attention_forward.4} parent=80 // loop_pre_header
                  _
                $region83: #{attention_forward.4} parent=80 // loop_header
                  %s299 = sphi 0, %s303
                  %p300 = scmp.ge.s32.totalorder %s299, 1
                  %s304 = sphi %s263, %s263
                  %s305 = sphi %s255, %s255
                $region84: #{attention_forward.4} parent=80 // loop_header_branch
                  %302 = sbr.rel (%p300) target = $region88
                $region85: #{attention_forward.4} parent=80 // loop_body
                  %v306 = vld [vmem:[%s304] sm:$0xff]
                  %307 = vst [vmem:[%s305] sm:$0xff] %v306
                  %v308 = vld [vmem:[%s304 + $0x18] sm:$0xff]
                  %309 = vst [vmem:[%s305 + $0x8] sm:$0xff] %v308
                  %v310 = vld [vmem:[%s304 + $0x30] sm:$0xff]
                  %311 = vst [vmem:[%s305 + $0x10] sm:$0xff] %v310
                  %v312 = vld [vmem:[%s304 + $0x48] sm:$0xff]
                  %313 = vst [vmem:[%s305 + $0x18] sm:$0xff] %v312
                  %v314 = vld [vmem:[%s304 + $0x60] sm:$0xff]
                  %315 = vst [vmem:[%s305 + $0x20] sm:$0xff] %v314
                  %v316 = vld [vmem:[%s304 + $0x78] sm:$0xff]
                  %317 = vst [vmem:[%s305 + $0x28] sm:$0xff] %v316
                  %v318 = vld [vmem:[%s304 + $0x90] sm:$0xff]
                  %319 = vst [vmem:[%s305 + $0x30] sm:$0xff] %v318
                  %v320 = vld [vmem:[%s304 + $0xa8] sm:$0xff]
                  %321 = vst [vmem:[%s305 + $0x38] sm:$0xff] %v320
                $region86: #{attention_forward.4} parent=80 // loop_footer
                  %s303 = sadd.s32 1, %s299
                $region87: #{attention_forward.4} parent=80 // loop_footer_branch
                  %298 = sbr.rel target = $region83
                $region88: #{attention_forward.4} parent=80 // loop_exit
                  _
              $region81: #{attention_forward.4} parent=65 // pred_fallthru
                _
              // Predicated region
              $region89: #{attention_forward.4} parent=65 // pred_check
                _
              $region90: #{attention_forward.4} parent=65 // pred_check_branch
                %323 = sbr.rel target = $region92
              $region91: #{attention_forward.4} parent=65 // pred_region
                _
              $region92: #{attention_forward.4} parent=65 // pred_fallthru
                _
            $region66: #{attention_forward.4} parent=61 // pred_fallthru
              _
            // Predicated region
            $region67: #{attention_forward.4} parent=61 // pred_check
              _
            $region68: #{attention_forward.4} parent=61 // pred_check_branch
              %269 = sbr.rel target = $region70
            $region69: #{attention_forward.4} parent=61 // pred_region
              %s271 = ssub.s32 256, 1
              loop: start=0, step=1, limit=1
              $region71: #{attention_forward.4} parent=69 // loop_pre_header
                _
              $region72: #{attention_forward.4} parent=69 // loop_header
                %s273 = sphi 0, %s277
                %p274 = scmp.ge.s32.totalorder %s273, 1
                %s278 = sphi %s263, %s263
                %s279 = sphi %s255, %s255
              $region73: #{attention_forward.4} parent=69 // loop_header_branch
                %276 = sbr.rel (%p274) target = $region77
              $region74: #{attention_forward.4} parent=69 // loop_body
                %v280 = vld [vmem:[%s278] sm:%s271]
                %281 = vst [vmem:[%s279] sm:%s271] %v280
                %v282 = vld [vmem:[%s278 + $0x18] sm:%s271]
                %283 = vst [vmem:[%s279 + $0x8] sm:%s271] %v282
                %v284 = vld [vmem:[%s278 + $0x30] sm:%s271]
                %285 = vst [vmem:[%s279 + $0x10] sm:%s271] %v284
                %v286 = vld [vmem:[%s278 + $0x48] sm:%s271]
                %287 = vst [vmem:[%s279 + $0x18] sm:%s271] %v286
                %v288 = vld [vmem:[%s278 + $0x60] sm:%s271]
                %289 = vst [vmem:[%s279 + $0x20] sm:%s271] %v288
                %v290 = vld [vmem:[%s278 + $0x78] sm:%s271]
                %291 = vst [vmem:[%s279 + $0x28] sm:%s271] %v290
                %v292 = vld [vmem:[%s278 + $0x90] sm:%s271]
                %293 = vst [vmem:[%s279 + $0x30] sm:%s271] %v292
                %v294 = vld [vmem:[%s278 + $0xa8] sm:%s271]
                %295 = vst [vmem:[%s279 + $0x38] sm:%s271] %v294
              $region75: #{attention_forward.4} parent=69 // loop_footer
                %s277 = sadd.s32 1, %s273
              $region76: #{attention_forward.4} parent=69 // loop_footer_branch
                %272 = sbr.rel target = $region72
              $region77: #{attention_forward.4} parent=69 // loop_exit
                _
            $region70: #{attention_forward.4} parent=61 // pred_fallthru
              _
          $region62: #{attention_forward.4} parent=57 // pred_fallthru
            _
          %324 = vnop
        $region58: #{attention_forward.4} parent=15 // pred_fallthru
          _
        // Predicated region
        $region93: #{attention_forward.4} parent=15 // pred_check
          %p325 = pneg %p119
        $region94: #{attention_forward.4} parent=15 // pred_check_branch
          %327 = sbr.rel (%p325) target = $region96
        $region95: #{attention_forward.4} parent=15 // pred_region
          %s328 = sand.u32 %s109, 1
          %s329 = sand.u32 %s109, 1
          %s330 = smul.addr %s329, 64
          %s331 = scalar_lea.vmem [#allocation8], %s330
          %s332 = smul.u32 8, %s19
          %s333 = sadd.s32 %s17, 2
          %s334 = smul.addr %s332, 3
          %s335 = sadd.s32 %s333, %s334
          %s336 = smul.addr %s16, 24
          %s337 = sadd.s32 %s335, %s336
          %s338 = smul.addr %s337, 8
          %s339 = scalar_lea.vmem %s2, %s338
          // Predicated region
          $region97: #{attention_forward.4} parent=95 // pred_check
            _
          $region98: #{attention_forward.4} parent=95 // pred_check_branch
            %341 = sbr.rel (0) target = $region100
          $region99: #{attention_forward.4} parent=95 // pred_region
            // Predicated region
            $region101: #{attention_forward.4} parent=99 // pred_check
              _
            $region102: #{attention_forward.4} parent=99 // pred_check_branch
              %343 = sbr.rel (0) target = $region104
            $region103: #{attention_forward.4} parent=99 // pred_region
              // Predicated region
              $region116: #{attention_forward.4} parent=103 // pred_check
                _
              $region117: #{attention_forward.4} parent=103 // pred_check_branch
                %373 = sbr.rel (0) target = $region119
              $region118: #{attention_forward.4} parent=103 // pred_region
                loop: start=0, step=1, limit=1
                $region120: #{attention_forward.4} parent=118 // loop_pre_header
                  _
                $region121: #{attention_forward.4} parent=118 // loop_header
                  %s375 = sphi 0, %s379
                  %p376 = scmp.ge.s32.totalorder %s375, 1
                  %s380 = sphi %s339, %s339
                  %s381 = sphi %s331, %s331
                $region122: #{attention_forward.4} parent=118 // loop_header_branch
                  %378 = sbr.rel (%p376) target = $region126
                $region123: #{attention_forward.4} parent=118 // loop_body
                  %v382 = vld [vmem:[%s380] sm:$0xff]
                  %383 = vst [vmem:[%s381] sm:$0xff] %v382
                  %v384 = vld [vmem:[%s380 + $0x18] sm:$0xff]
                  %385 = vst [vmem:[%s381 + $0x8] sm:$0xff] %v384
                  %v386 = vld [vmem:[%s380 + $0x30] sm:$0xff]
                  %387 = vst [vmem:[%s381 + $0x10] sm:$0xff] %v386
                  %v388 = vld [vmem:[%s380 + $0x48] sm:$0xff]
                  %389 = vst [vmem:[%s381 + $0x18] sm:$0xff] %v388
                  %v390 = vld [vmem:[%s380 + $0x60] sm:$0xff]
                  %391 = vst [vmem:[%s381 + $0x20] sm:$0xff] %v390
                  %v392 = vld [vmem:[%s380 + $0x78] sm:$0xff]
                  %393 = vst [vmem:[%s381 + $0x28] sm:$0xff] %v392
                  %v394 = vld [vmem:[%s380 + $0x90] sm:$0xff]
                  %395 = vst [vmem:[%s381 + $0x30] sm:$0xff] %v394
                  %v396 = vld [vmem:[%s380 + $0xa8] sm:$0xff]
                  %397 = vst [vmem:[%s381 + $0x38] sm:$0xff] %v396
                $region124: #{attention_forward.4} parent=118 // loop_footer
                  %s379 = sadd.s32 1, %s375
                $region125: #{attention_forward.4} parent=118 // loop_footer_branch
                  %374 = sbr.rel target = $region121
                $region126: #{attention_forward.4} parent=118 // loop_exit
                  _
              $region119: #{attention_forward.4} parent=103 // pred_fallthru
                _
              // Predicated region
              $region127: #{attention_forward.4} parent=103 // pred_check
                _
              $region128: #{attention_forward.4} parent=103 // pred_check_branch
                %399 = sbr.rel target = $region130
              $region129: #{attention_forward.4} parent=103 // pred_region
                _
              $region130: #{attention_forward.4} parent=103 // pred_fallthru
                _
            $region104: #{attention_forward.4} parent=99 // pred_fallthru
              _
            // Predicated region
            $region105: #{attention_forward.4} parent=99 // pred_check
              _
            $region106: #{attention_forward.4} parent=99 // pred_check_branch
              %345 = sbr.rel target = $region108
            $region107: #{attention_forward.4} parent=99 // pred_region
              %s347 = ssub.s32 256, 1
              loop: start=0, step=1, limit=1
              $region109: #{attention_forward.4} parent=107 // loop_pre_header
                _
              $region110: #{attention_forward.4} parent=107 // loop_header
                %s349 = sphi 0, %s353
                %p350 = scmp.ge.s32.totalorder %s349, 1
                %s354 = sphi %s339, %s339
                %s355 = sphi %s331, %s331
              $region111: #{attention_forward.4} parent=107 // loop_header_branch
                %352 = sbr.rel (%p350) target = $region115
              $region112: #{attention_forward.4} parent=107 // loop_body
                %v356 = vld [vmem:[%s354] sm:%s347]
                %357 = vst [vmem:[%s355] sm:%s347] %v356
                %v358 = vld [vmem:[%s354 + $0x18] sm:%s347]
                %359 = vst [vmem:[%s355 + $0x8] sm:%s347] %v358
                %v360 = vld [vmem:[%s354 + $0x30] sm:%s347]
                %361 = vst [vmem:[%s355 + $0x10] sm:%s347] %v360
                %v362 = vld [vmem:[%s354 + $0x48] sm:%s347]
                %363 = vst [vmem:[%s355 + $0x18] sm:%s347] %v362
                %v364 = vld [vmem:[%s354 + $0x60] sm:%s347]
                %365 = vst [vmem:[%s355 + $0x20] sm:%s347] %v364
                %v366 = vld [vmem:[%s354 + $0x78] sm:%s347]
                %367 = vst [vmem:[%s355 + $0x28] sm:%s347] %v366
                %v368 = vld [vmem:[%s354 + $0x90] sm:%s347]
                %369 = vst [vmem:[%s355 + $0x30] sm:%s347] %v368
                %v370 = vld [vmem:[%s354 + $0xa8] sm:%s347]
                %371 = vst [vmem:[%s355 + $0x38] sm:%s347] %v370
              $region113: #{attention_forward.4} parent=107 // loop_footer
                %s353 = sadd.s32 1, %s349
              $region114: #{attention_forward.4} parent=107 // loop_footer_branch
                %348 = sbr.rel target = $region110
              $region115: #{attention_forward.4} parent=107 // loop_exit
                _
            $region108: #{attention_forward.4} parent=99 // pred_fallthru
              _
          $region100: #{attention_forward.4} parent=95 // pred_fallthru
            _
          %400 = vnop
        $region96: #{attention_forward.4} parent=15 // pred_fallthru
          _
      $region16: #{attention_forward.4} parent=5 // pred_fallthru
        _
      %p401 = scmp.le.s32.totalorder 1, %s9
      %p402 = scmp.lt.s32.totalorder %s9, 3
      %p403 = pnand %p401, %p402
      %p404 = pneg %p403
      // Predicated region
      $region131: #{attention_forward.4} parent=5 // pred_check
        _
      $region132: #{attention_forward.4} parent=5 // pred_check_branch
        %406 = sbr.rel (%p403) target = $region134
      $region133: #{attention_forward.4} parent=5 // pred_region
        %s407 = ssub.s32 %s9, 1
        %s408 = sand.u32 %s52, 1
        %s409 = sand.u32 %s52, 1
        %s410 = smul.addr %s409, 64
        %s411 = scalar_lea.vmem [#allocation6], %s410
        // Predicated region
        $region135: #{attention_forward.4} parent=133 // pred_check
          %p412 = pneg %p65
        $region136: #{attention_forward.4} parent=133 // pred_check_branch
          %414 = sbr.rel (%p412) target = $region138
        $region137: #{attention_forward.4} parent=133 // pred_region
          _
        $region138: #{attention_forward.4} parent=133 // pred_fallthru
          _
        %s415 = sand.u32 %s82, 1
        %s416 = sand.u32 %s82, 1
        %s417 = smul.addr %s416, 64
        %s418 = scalar_lea.vmem [#allocation7], %s417
        // Predicated region
        $region139: #{attention_forward.4} parent=133 // pred_check
          %p419 = pneg %p95
        $region140: #{attention_forward.4} parent=133 // pred_check_branch
          %421 = sbr.rel (%p419) target = $region142
        $region141: #{attention_forward.4} parent=133 // pred_region
          _
        $region142: #{attention_forward.4} parent=133 // pred_fallthru
          _
        %s422 = sand.u32 %s112, 1
        %s423 = sand.u32 %s112, 1
        %s424 = smul.addr %s423, 64
        %s425 = scalar_lea.vmem [#allocation8], %s424
        // Predicated region
        $region143: #{attention_forward.4} parent=133 // pred_check
          %p426 = pneg %p125
        $region144: #{attention_forward.4} parent=133 // pred_check_branch
          %428 = sbr.rel (%p426) target = $region146
        $region145: #{attention_forward.4} parent=133 // pred_region
          _
        $region146: #{attention_forward.4} parent=133 // pred_fallthru
          _
        %s429 = sand.u32 %s52, 1
        %s430 = sand.u32 %s52, 1
        %s431 = smul.addr %s430, 64
        %s432 = scalar_lea.vmem [#allocation6], %s431
        %p433 = pneg %p65
        %p434 = pneg %p62
        %s435 = sand.u32 %s82, 1
        %s436 = sand.u32 %s82, 1
        %s437 = smul.addr %s436, 64
        %s438 = scalar_lea.vmem [#allocation7], %s437
        %p439 = pneg %p95
        %p440 = pneg %p92
        %s441 = sand.u32 %s112, 1
        %s442 = sand.u32 %s112, 1
        %s443 = smul.addr %s442, 64
        %s444 = scalar_lea.vmem [#allocation8], %s443
        %p445 = pneg %p125
        %p446 = pneg %p122
        %p447 = pneg %p155
        %p448 = pneg %p152
        %p449 = scmp.lt.s32.totalorder %s20, 1
        %s450 = scalar_select %p449, %s20, 1
        %p451 = scmp.lt.s32.totalorder %s22, 0
        %s452 = scalar_select %p451, %s22, 0
        %p453 = scmp.lt.s32.totalorder %s21, 0
        %s454 = scalar_select %p453, %s21, 0
        %s455 = sadd.s32 %s454, %s452
        %s456 = sadd.s32 %s455, %s450
        %s457 = smul.addr %s456, 8
        %s458 = scalar_lea.vmem %s3, %s457
        %s459 = smul.u32 8, %s22
        %s460 = smul.u32 8, %s23
        %s461 = smul.u32 8, %s23
        %p462 = scmp.lt.s32.totalorder %s20, 1
        %s463 = scalar_select %p462, %s20, 1
        %p464 = scmp.lt.s32.totalorder %s22, 0
        %s465 = scalar_select %p464, %s22, 0
        %p466 = scmp.lt.s32.totalorder %s21, 0
        %s467 = scalar_select %p466, %s21, 0
        %s468 = sadd.s32 %s467, %s465
        %s469 = sadd.s32 %s468, %s463
        %s470 = smul.addr %s469, 8
        %s471 = scalar_lea.vmem %s3, %s470
        %p472 = scmp.eq.s32.totalorder %s23, 0
        // Predicated region
        $region147: #{attention_forward.4} parent=133 // pred_check
          %p473 = pneg %p472
        $region148: #{attention_forward.4} parent=133 // pred_check_branch
          %475 = sbr.rel (%p473) target = $region150
        $region149: #{attention_forward.4} parent=133 // pred_region
          %v476 = vld [vmem:[%s411] sm:$0xff]
          %v477 = vld [vmem:[%s411 + $0x8] sm:$0xff]
          %v478 = vld [vmem:[%s411 + $0x10] sm:$0xff]
          %v479 = vld [vmem:[%s411 + $0x18] sm:$0xff]
          %v480 = vld [vmem:[%s411 + $0x20] sm:$0xff]
          %v481 = vld [vmem:[%s411 + $0x28] sm:$0xff]
          %v482 = vld [vmem:[%s411 + $0x30] sm:$0xff]
          %v483 = vld [vmem:[%s411 + $0x38] sm:$0xff]
          %v484 = vrot.slane %v478, 4
          %vm485 = vcmask 1047556
          %v486 = vsel %vm485, %v484, %v476
          %v487 = vrot.slane %v476, 4
          %v488 = vsel %vm485, %v478, %v487
          %v490 = vunpack.c.l.s4 1983009808
          %v491 = vunpack.c.0.s8 %v490
          %v492 = vperm.slane %v486, %v491
          %v494 = vunpack.c.l.s4 1983009808
          %v495 = vunpack.c.0.s8 %v494
          %v496 = vperm.slane %v488, %v495
          %v497 = vrot.slane %v479, 4
          %v498 = vsel %vm485, %v497, %v477
          %v499 = vrot.slane %v477, 4
          %v500 = vsel %vm485, %v479, %v499
          %v502 = vunpack.c.l.s4 1983009808
          %v503 = vunpack.c.0.s8 %v502
          %v504 = vperm.slane %v498, %v503
          %v506 = vunpack.c.l.s4 1983009808
          %v507 = vunpack.c.0.s8 %v506
          %v508 = vperm.slane %v500, %v507
          %v509 = vrot.slane %v482, 4
          %v510 = vsel %vm485, %v509, %v480
          %v511 = vrot.slane %v480, 4
          %v512 = vsel %vm485, %v482, %v511
          %v514 = vunpack.c.l.s4 1983009808
          %v515 = vunpack.c.0.s8 %v514
          %v516 = vperm.slane %v510, %v515
          %v518 = vunpack.c.l.s4 1983009808
          %v519 = vunpack.c.0.s8 %v518
          %v520 = vperm.slane %v512, %v519
          %v521 = vrot.slane %v483, 4
          %v522 = vsel %vm485, %v521, %v481
          %v523 = vrot.slane %v481, 4
          %v524 = vsel %vm485, %v483, %v523
          %v526 = vunpack.c.l.s4 1983009808
          %v527 = vunpack.c.0.s8 %v526
          %v528 = vperm.slane %v522, %v527
          %v530 = vunpack.c.l.s4 1983009808
          %v531 = vunpack.c.0.s8 %v530
          %v532 = vperm.slane %v524, %v531
          %v533 = vrot.slane %v504, 4
          %v534 = vsel %vm485, %v533, %v492
          %v535 = vrot.slane %v492, 4
          %v536 = vsel %vm485, %v504, %v535
          %v538 = vunpack.c.l.s4 1934713408
          %v539 = vunpack.c.0.s8 %v538
          %v540 = vperm.slane %v534, %v539
          %v542 = vunpack.c.l.s4 1934713408
          %v543 = vunpack.c.0.s8 %v542
          %v544 = vperm.slane %v536, %v543
          %v545 = vrot.slane %v508, 4
          %v546 = vsel %vm485, %v545, %v496
          %v547 = vrot.slane %v496, 4
          %v548 = vsel %vm485, %v508, %v547
          %v550 = vunpack.c.l.s4 1934713408
          %v551 = vunpack.c.0.s8 %v550
          %v552 = vperm.slane %v546, %v551
          %v554 = vunpack.c.l.s4 1934713408
          %v555 = vunpack.c.0.s8 %v554
          %v556 = vperm.slane %v548, %v555
          %v557 = vrot.slane %v528, 4
          %v558 = vsel %vm485, %v557, %v516
          %v559 = vrot.slane %v516, 4
          %v560 = vsel %vm485, %v528, %v559
          %v562 = vunpack.c.l.s4 1934713408
          %v563 = vunpack.c.0.s8 %v562
          %v564 = vperm.slane %v558, %v563
          %v566 = vunpack.c.l.s4 1934713408
          %v567 = vunpack.c.0.s8 %v566
          %v568 = vperm.slane %v560, %v567
          %v569 = vrot.slane %v532, 4
          %v570 = vsel %vm485, %v569, %v520
          %v571 = vrot.slane %v520, 4
          %v572 = vsel %vm485, %v532, %v571
          %v574 = vunpack.c.l.s4 1934713408
          %v575 = vunpack.c.0.s8 %v574
          %v576 = vperm.slane %v570, %v575
          %v578 = vunpack.c.l.s4 1934713408
          %v579 = vunpack.c.0.s8 %v578
          %v580 = vperm.slane %v572, %v579
          %v581 = vrot.slane %v564, 4
          %v582 = vsel %vm485, %v581, %v540
          %v583 = vrot.slane %v540, 4
          %v584 = vsel %vm485, %v564, %v583
          %v585 = vrot.slane %v568, 4
          %v586 = vsel %vm485, %v585, %v544
          %v587 = vrot.slane %v544, 4
          %v588 = vsel %vm485, %v568, %v587
          %v589 = vrot.slane %v576, 4
          %v590 = vsel %vm485, %v589, %v552
          %v591 = vrot.slane %v552, 4
          %v592 = vsel %vm485, %v576, %v591
          %v593 = vrot.slane %v580, 4
          %v594 = vsel %vm485, %v593, %v556
          %v595 = vrot.slane %v556, 4
          %v596 = vsel %vm485, %v580, %v595
          %v597 = vmul.f32 %v582, 0.35355338
          %v598 = vmul.f32 %v584, 0.35355338
          %v599 = vmul.f32 %v586, 0.35355338
          %v600 = vmul.f32 %v588, 0.35355338
          %v601 = vmul.f32 %v590, 0.35355338
          %v602 = vmul.f32 %v592, 0.35355338
          %v603 = vmul.f32 %v594, 0.35355338
          %v604 = vmul.f32 %v596, 0.35355338
          %vm605 = vcmask 64512
          %606 = vst.msk [vmem:[#allocation2] sm:$0xff] %vm605, %v597
          %607 = vst.msk [vmem:[#allocation2 + $0x8] sm:$0xff] %vm605, %v598
          %608 = vst.msk [vmem:[#allocation2 + $0x10] sm:$0xff] %vm605, %v599
          %609 = vst.msk [vmem:[#allocation2 + $0x18] sm:$0xff] %vm605, %v600
          %610 = vst.msk [vmem:[#allocation2 + $0x20] sm:$0xff] %vm605, %v601
          %611 = vst.msk [vmem:[#allocation2 + $0x28] sm:$0xff] %vm605, %v602
          %612 = vst.msk [vmem:[#allocation2 + $0x30] sm:$0xff] %vm605, %v603
          %613 = vst.msk [vmem:[#allocation2 + $0x38] sm:$0xff] %vm605, %v604
          %vm614 = vcmask 7168
          %615 = vst.msk [vmem:[#allocation3] sm:$0xff] %vm614, -inf
          %616 = vst.msk [vmem:[#allocation3 + $0x8] sm:$0xff] %vm614, -inf
          %617 = vst.msk [vmem:[#allocation3 + $0x10] sm:$0xff] %vm614, -inf
          %618 = vst.msk [vmem:[#allocation3 + $0x18] sm:$0xff] %vm614, -inf
          %619 = vst.msk [vmem:[#allocation3 + $0x20] sm:$0xff] %vm614, -inf
          %620 = vst.msk [vmem:[#allocation3 + $0x28] sm:$0xff] %vm614, -inf
          %621 = vst.msk [vmem:[#allocation3 + $0x30] sm:$0xff] %vm614, -inf
          %622 = vst.msk [vmem:[#allocation3 + $0x38] sm:$0xff] %vm614, -inf
          %623 = vst.msk [vmem:[#allocation4] sm:$0xff] %vm614, 0.0
          %624 = vst.msk [vmem:[#allocation4 + $0x8] sm:$0xff] %vm614, 0.0
          %625 = vst.msk [vmem:[#allocation4 + $0x10] sm:$0xff] %vm614, 0.0
          %626 = vst.msk [vmem:[#allocation4 + $0x18] sm:$0xff] %vm614, 0.0
          %627 = vst.msk [vmem:[#allocation4 + $0x20] sm:$0xff] %vm614, 0.0
          %628 = vst.msk [vmem:[#allocation4 + $0x28] sm:$0xff] %vm614, 0.0
          %629 = vst.msk [vmem:[#allocation4 + $0x30] sm:$0xff] %vm614, 0.0
          %630 = vst.msk [vmem:[#allocation4 + $0x38] sm:$0xff] %vm614, 0.0
          %631 = vst.msk [vmem:[#allocation5] sm:$0xff] %vm605, 0.0
          %632 = vst.msk [vmem:[#allocation5 + $0x8] sm:$0xff] %vm605, 0.0
          %633 = vst.msk [vmem:[#allocation5 + $0x10] sm:$0xff] %vm605, 0.0
          %634 = vst.msk [vmem:[#allocation5 + $0x18] sm:$0xff] %vm605, 0.0
          %635 = vst.msk [vmem:[#allocation5 + $0x20] sm:$0xff] %vm605, 0.0
          %636 = vst.msk [vmem:[#allocation5 + $0x28] sm:$0xff] %vm605, 0.0
          %637 = vst.msk [vmem:[#allocation5 + $0x30] sm:$0xff] %vm605, 0.0
          %638 = vst.msk [vmem:[#allocation5 + $0x38] sm:$0xff] %vm605, 0.0
        $region150: #{attention_forward.4} parent=133 // pred_fallthru
          _
        %v639 = vld [vmem:[%s418] sm:$0xff]
        %v640 = vld [vmem:[%s418 + $0x8] sm:$0xff]
        %v641 = vld [vmem:[%s418 + $0x10] sm:$0xff]
        %v642 = vld [vmem:[%s418 + $0x18] sm:$0xff]
        %v643 = vld [vmem:[%s418 + $0x20] sm:$0xff]
        %v644 = vld [vmem:[%s418 + $0x28] sm:$0xff]
        %v645 = vld [vmem:[%s418 + $0x30] sm:$0xff]
        %v646 = vld [vmem:[%s418 + $0x38] sm:$0xff]
        %v647 = vrot.slane %v641, 4
        %vm648 = vcmask 1047556
        %v649 = vsel %vm648, %v647, %v639
        %v650 = vrot.slane %v639, 4
        %v651 = vsel %vm648, %v641, %v650
        %v653 = vunpack.c.l.s4 1983009808
        %v654 = vunpack.c.0.s8 %v653
        %v655 = vperm.slane %v649, %v654
        %v657 = vunpack.c.l.s4 1983009808
        %v658 = vunpack.c.0.s8 %v657
        %v659 = vperm.slane %v651, %v658
        %v660 = vrot.slane %v642, 4
        %v661 = vsel %vm648, %v660, %v640
        %v662 = vrot.slane %v640, 4
        %v663 = vsel %vm648, %v642, %v662
        %v665 = vunpack.c.l.s4 1983009808
        %v666 = vunpack.c.0.s8 %v665
        %v667 = vperm.slane %v661, %v666
        %v669 = vunpack.c.l.s4 1983009808
        %v670 = vunpack.c.0.s8 %v669
        %v671 = vperm.slane %v663, %v670
        %v672 = vrot.slane %v645, 4
        %v673 = vsel %vm648, %v672, %v643
        %v674 = vrot.slane %v643, 4
        %v675 = vsel %vm648, %v645, %v674
        %v677 = vunpack.c.l.s4 1983009808
        %v678 = vunpack.c.0.s8 %v677
        %v679 = vperm.slane %v673, %v678
        %v681 = vunpack.c.l.s4 1983009808
        %v682 = vunpack.c.0.s8 %v681
        %v683 = vperm.slane %v675, %v682
        %v684 = vrot.slane %v646, 4
        %v685 = vsel %vm648, %v684, %v644
        %v686 = vrot.slane %v644, 4
        %v687 = vsel %vm648, %v646, %v686
        %v689 = vunpack.c.l.s4 1983009808
        %v690 = vunpack.c.0.s8 %v689
        %v691 = vperm.slane %v685, %v690
        %v693 = vunpack.c.l.s4 1983009808
        %v694 = vunpack.c.0.s8 %v693
        %v695 = vperm.slane %v687, %v694
        %v696 = vrot.slane %v667, 4
        %v697 = vsel %vm648, %v696, %v655
        %v698 = vrot.slane %v655, 4
        %v699 = vsel %vm648, %v667, %v698
        %v701 = vunpack.c.l.s4 1934713408
        %v702 = vunpack.c.0.s8 %v701
        %v703 = vperm.slane %v697, %v702
        %v705 = vunpack.c.l.s4 1934713408
        %v706 = vunpack.c.0.s8 %v705
        %v707 = vperm.slane %v699, %v706
        %v708 = vrot.slane %v671, 4
        %v709 = vsel %vm648, %v708, %v659
        %v710 = vrot.slane %v659, 4
        %v711 = vsel %vm648, %v671, %v710
        %v713 = vunpack.c.l.s4 1934713408
        %v714 = vunpack.c.0.s8 %v713
        %v715 = vperm.slane %v709, %v714
        %v717 = vunpack.c.l.s4 1934713408
        %v718 = vunpack.c.0.s8 %v717
        %v719 = vperm.slane %v711, %v718
        %v720 = vrot.slane %v691, 4
        %v721 = vsel %vm648, %v720, %v679
        %v722 = vrot.slane %v679, 4
        %v723 = vsel %vm648, %v691, %v722
        %v725 = vunpack.c.l.s4 1934713408
        %v726 = vunpack.c.0.s8 %v725
        %v727 = vperm.slane %v721, %v726
        %v729 = vunpack.c.l.s4 1934713408
        %v730 = vunpack.c.0.s8 %v729
        %v731 = vperm.slane %v723, %v730
        %v732 = vrot.slane %v695, 4
        %v733 = vsel %vm648, %v732, %v683
        %v734 = vrot.slane %v683, 4
        %v735 = vsel %vm648, %v695, %v734
        %v737 = vunpack.c.l.s4 1934713408
        %v738 = vunpack.c.0.s8 %v737
        %v739 = vperm.slane %v733, %v738
        %v741 = vunpack.c.l.s4 1934713408
        %v742 = vunpack.c.0.s8 %v741
        %v743 = vperm.slane %v735, %v742
        %v744 = vrot.slane %v727, 4
        %v745 = vsel %vm648, %v744, %v703
        %v746 = vrot.slane %v703, 4
        %v747 = vsel %vm648, %v727, %v746
        %v748 = vrot.slane %v731, 4
        %v749 = vsel %vm648, %v748, %v707
        %v750 = vrot.slane %v707, 4
        %v751 = vsel %vm648, %v731, %v750
        %v752 = vrot.slane %v739, 4
        %v753 = vsel %vm648, %v752, %v715
        %v754 = vrot.slane %v715, 4
        %v755 = vsel %vm648, %v739, %v754
        %v756 = vrot.slane %v743, 4
        %v757 = vsel %vm648, %v756, %v719
        %v758 = vrot.slane %v719, 4
        %v759 = vsel %vm648, %v743, %v758
        %v760 = vld [vmem:[%s425] sm:$0xff]
        %v761 = vld [vmem:[%s425 + $0x8] sm:$0xff]
        %v762 = vld [vmem:[%s425 + $0x10] sm:$0xff]
        %v763 = vld [vmem:[%s425 + $0x18] sm:$0xff]
        %v764 = vld [vmem:[%s425 + $0x20] sm:$0xff]
        %v765 = vld [vmem:[%s425 + $0x28] sm:$0xff]
        %v766 = vld [vmem:[%s425 + $0x30] sm:$0xff]
        %v767 = vld [vmem:[%s425 + $0x38] sm:$0xff]
        %v768 = vrot.slane %v762, 4
        %v769 = vsel %vm648, %v768, %v760
        %v770 = vrot.slane %v760, 4
        %v771 = vsel %vm648, %v762, %v770
        %v773 = vunpack.c.l.s4 1983009808
        %v774 = vunpack.c.0.s8 %v773
        %v775 = vperm.slane %v769, %v774
        %v777 = vunpack.c.l.s4 1983009808
        %v778 = vunpack.c.0.s8 %v777
        %v779 = vperm.slane %v771, %v778
        %v780 = vrot.slane %v763, 4
        %v781 = vsel %vm648, %v780, %v761
        %v782 = vrot.slane %v761, 4
        %v783 = vsel %vm648, %v763, %v782
        %v785 = vunpack.c.l.s4 1983009808
        %v786 = vunpack.c.0.s8 %v785
        %v787 = vperm.slane %v781, %v786
        %v789 = vunpack.c.l.s4 1983009808
        %v790 = vunpack.c.0.s8 %v789
        %v791 = vperm.slane %v783, %v790
        %v792 = vrot.slane %v766, 4
        %v793 = vsel %vm648, %v792, %v764
        %v794 = vrot.slane %v764, 4
        %v795 = vsel %vm648, %v766, %v794
        %v797 = vunpack.c.l.s4 1983009808
        %v798 = vunpack.c.0.s8 %v797
        %v799 = vperm.slane %v793, %v798
        %v801 = vunpack.c.l.s4 1983009808
        %v802 = vunpack.c.0.s8 %v801
        %v803 = vperm.slane %v795, %v802
        %v804 = vrot.slane %v767, 4
        %v805 = vsel %vm648, %v804, %v765
        %v806 = vrot.slane %v765, 4
        %v807 = vsel %vm648, %v767, %v806
        %v809 = vunpack.c.l.s4 1983009808
        %v810 = vunpack.c.0.s8 %v809
        %v811 = vperm.slane %v805, %v810
        %v813 = vunpack.c.l.s4 1983009808
        %v814 = vunpack.c.0.s8 %v813
        %v815 = vperm.slane %v807, %v814
        %v816 = vrot.slane %v787, 4
        %v817 = vsel %vm648, %v816, %v775
        %v818 = vrot.slane %v775, 4
        %v819 = vsel %vm648, %v787, %v818
        %v821 = vunpack.c.l.s4 1934713408
        %v822 = vunpack.c.0.s8 %v821
        %v823 = vperm.slane %v817, %v822
        %v825 = vunpack.c.l.s4 1934713408
        %v826 = vunpack.c.0.s8 %v825
        %v827 = vperm.slane %v819, %v826
        %v828 = vrot.slane %v791, 4
        %v829 = vsel %vm648, %v828, %v779
        %v830 = vrot.slane %v779, 4
        %v831 = vsel %vm648, %v791, %v830
        %v833 = vunpack.c.l.s4 1934713408
        %v834 = vunpack.c.0.s8 %v833
        %v835 = vperm.slane %v829, %v834
        %v837 = vunpack.c.l.s4 1934713408
        %v838 = vunpack.c.0.s8 %v837
        %v839 = vperm.slane %v831, %v838
        %v840 = vrot.slane %v811, 4
        %v841 = vsel %vm648, %v840, %v799
        %v842 = vrot.slane %v799, 4
        %v843 = vsel %vm648, %v811, %v842
        %v845 = vunpack.c.l.s4 1934713408
        %v846 = vunpack.c.0.s8 %v845
        %v847 = vperm.slane %v841, %v846
        %v849 = vunpack.c.l.s4 1934713408
        %v850 = vunpack.c.0.s8 %v849
        %v851 = vperm.slane %v843, %v850
        %v852 = vrot.slane %v815, 4
        %v853 = vsel %vm648, %v852, %v803
        %v854 = vrot.slane %v803, 4
        %v855 = vsel %vm648, %v815, %v854
        %v857 = vunpack.c.l.s4 1934713408
        %v858 = vunpack.c.0.s8 %v857
        %v859 = vperm.slane %v853, %v858
        %v861 = vunpack.c.l.s4 1934713408
        %v862 = vunpack.c.0.s8 %v861
        %v863 = vperm.slane %v855, %v862
        %v864 = vrot.slane %v847, 4
        %v865 = vsel %vm648, %v864, %v823
        %v866 = vrot.slane %v823, 4
        %v867 = vsel %vm648, %v847, %v866
        %v868 = vrot.slane %v851, 4
        %v869 = vsel %vm648, %v868, %v827
        %v870 = vrot.slane %v827, 4
        %v871 = vsel %vm648, %v851, %v870
        %v872 = vrot.slane %v859, 4
        %v873 = vsel %vm648, %v872, %v835
        %v874 = vrot.slane %v835, 4
        %v875 = vsel %vm648, %v859, %v874
        %v876 = vrot.slane %v863, 4
        %v877 = vsel %vm648, %v876, %v839
        %v878 = vrot.slane %v839, 4
        %v879 = vsel %vm648, %v863, %v878
        %v880 = vld [vmem:[#allocation2] sm:$0xff]
        %v881 = vld [vmem:[#allocation2 + $0x8] sm:$0xff]
        %v882 = vld [vmem:[#allocation2 + $0x10] sm:$0xff]
        %v883 = vld [vmem:[#allocation2 + $0x18] sm:$0xff]
        %v884 = vld [vmem:[#allocation2 + $0x20] sm:$0xff]
        %v885 = vld [vmem:[#allocation2 + $0x28] sm:$0xff]
        %v886 = vld [vmem:[#allocation2 + $0x30] sm:$0xff]
        %v887 = vld [vmem:[#allocation2 + $0x38] sm:$0xff]
        %vm888 = vcmask 64512
        %v890 = vsel %vm888, %v880, 0
        %v893 = vsel %vm888, %v745, 0
        %895 = vmatpush.xpose.msra.mxu0 0.0
        %896 = vmatpush.xpose.msra.mxu0 0.0
        %897 = vmatpush.xpose.msra.mxu0 0.0
        %898 = vmatpush.xpose.msra.mxu0 0.0
        %899 = vmatpush.xpose.msra.mxu0 0.0
        %900 = vmatpush.xpose.msra.mxu0 0.0
        %901 = vmatpush.xpose.msra.mxu0 0.0
        %902 = vmatpush.xpose.msra.mxu0 0.0
        %903 = vmatpush.xpose.msra.mxu0 0.0
        %904 = vmatpush.xpose.msra.mxu0 0.0
        %905 = vmatpush.xpose.msra.mxu0 0.0
        %906 = vmatpush.xpose.msra.mxu0 0.0
        %907 = vmatpush.xpose.msra.mxu0 0.0
        %908 = vmatpush.xpose.msra.mxu0 0.0
        %909 = vmatpush.xpose.msra.mxu0 0.0
        %910 = vmatpush.xpose.msra.mxu0 %v893
        %911 = vmatmul.f32.gmra.mxu0 %v890
        %v912 = vpop.f32.mrf.mxu0
        %v913 = vadd.f32 0.0, %v912
        %914 = vdwg.mxu0
        %v916 = vsel %vm888, %v881, 0
        %v919 = vsel %vm888, %v747, 0
        %921 = vmatpush.xpose.msra.mxu0 0.0
        %922 = vmatpush.xpose.msra.mxu0 0.0
        %923 = vmatpush.xpose.msra.mxu0 0.0
        %924 = vmatpush.xpose.msra.mxu0 0.0
        %925 = vmatpush.xpose.msra.mxu0 0.0
        %926 = vmatpush.xpose.msra.mxu0 0.0
        %927 = vmatpush.xpose.msra.mxu0 0.0
        %928 = vmatpush.xpose.msra.mxu0 0.0
        %929 = vmatpush.xpose.msra.mxu0 0.0
        %930 = vmatpush.xpose.msra.mxu0 0.0
        %931 = vmatpush.xpose.msra.mxu0 0.0
        %932 = vmatpush.xpose.msra.mxu0 0.0
        %933 = vmatpush.xpose.msra.mxu0 0.0
        %934 = vmatpush.xpose.msra.mxu0 0.0
        %935 = vmatpush.xpose.msra.mxu0 0.0
        %936 = vmatpush.xpose.msra.mxu0 %v919
        %937 = vmatmul.f32.gmra.mxu0 %v916
        %v938 = vpop.f32.mrf.mxu0
        %v939 = vadd.f32 0.0, %v938
        %940 = vdwg.mxu0
        %v942 = vsel %vm888, %v882, 0
        %v945 = vsel %vm888, %v749, 0
        %947 = vmatpush.xpose.msra.mxu0 0.0
        %948 = vmatpush.xpose.msra.mxu0 0.0
        %949 = vmatpush.xpose.msra.mxu0 0.0
        %950 = vmatpush.xpose.msra.mxu0 0.0
        %951 = vmatpush.xpose.msra.mxu0 0.0
        %952 = vmatpush.xpose.msra.mxu0 0.0
        %953 = vmatpush.xpose.msra.mxu0 0.0
        %954 = vmatpush.xpose.msra.mxu0 0.0
        %955 = vmatpush.xpose.msra.mxu0 0.0
        %956 = vmatpush.xpose.msra.mxu0 0.0
        %957 = vmatpush.xpose.msra.mxu0 0.0
        %958 = vmatpush.xpose.msra.mxu0 0.0
        %959 = vmatpush.xpose.msra.mxu0 0.0
        %960 = vmatpush.xpose.msra.mxu0 0.0
        %961 = vmatpush.xpose.msra.mxu0 0.0
        %962 = vmatpush.xpose.msra.mxu0 %v945
        %963 = vmatmul.f32.gmra.mxu0 %v942
        %v964 = vpop.f32.mrf.mxu0
        %v965 = vadd.f32 0.0, %v964
        %966 = vdwg.mxu0
        %v968 = vsel %vm888, %v883, 0
        %v971 = vsel %vm888, %v751, 0
        %973 = vmatpush.xpose.msra.mxu0 0.0
        %974 = vmatpush.xpose.msra.mxu0 0.0
        %975 = vmatpush.xpose.msra.mxu0 0.0
        %976 = vmatpush.xpose.msra.mxu0 0.0
        %977 = vmatpush.xpose.msra.mxu0 0.0
        %978 = vmatpush.xpose.msra.mxu0 0.0
        %979 = vmatpush.xpose.msra.mxu0 0.0
        %980 = vmatpush.xpose.msra.mxu0 0.0
        %981 = vmatpush.xpose.msra.mxu0 0.0
        %982 = vmatpush.xpose.msra.mxu0 0.0
        %983 = vmatpush.xpose.msra.mxu0 0.0
        %984 = vmatpush.xpose.msra.mxu0 0.0
        %985 = vmatpush.xpose.msra.mxu0 0.0
        %986 = vmatpush.xpose.msra.mxu0 0.0
        %987 = vmatpush.xpose.msra.mxu0 0.0
        %988 = vmatpush.xpose.msra.mxu0 %v971
        %989 = vmatmul.f32.gmra.mxu0 %v968
        %v990 = vpop.f32.mrf.mxu0
        %v991 = vadd.f32 0.0, %v990
        %992 = vdwg.mxu0
        %v994 = vsel %vm888, %v884, 0
        %v997 = vsel %vm888, %v753, 0
        %999 = vmatpush.xpose.msra.mxu0 0.0
        %1000 = vmatpush.xpose.msra.mxu0 0.0
        %1001 = vmatpush.xpose.msra.mxu0 0.0
        %1002 = vmatpush.xpose.msra.mxu0 0.0
        %1003 = vmatpush.xpose.msra.mxu0 0.0
        %1004 = vmatpush.xpose.msra.mxu0 0.0
        %1005 = vmatpush.xpose.msra.mxu0 0.0
        %1006 = vmatpush.xpose.msra.mxu0 0.0
        %1007 = vmatpush.xpose.msra.mxu0 0.0
        %1008 = vmatpush.xpose.msra.mxu0 0.0
        %1009 = vmatpush.xpose.msra.mxu0 0.0
        %1010 = vmatpush.xpose.msra.mxu0 0.0
        %1011 = vmatpush.xpose.msra.mxu0 0.0
        %1012 = vmatpush.xpose.msra.mxu0 0.0
        %1013 = vmatpush.xpose.msra.mxu0 0.0
        %1014 = vmatpush.xpose.msra.mxu0 %v997
        %1015 = vmatmul.f32.gmra.mxu0 %v994
        %v1016 = vpop.f32.mrf.mxu0
        %v1017 = vadd.f32 0.0, %v1016
        %1018 = vdwg.mxu0
        %v1020 = vsel %vm888, %v885, 0
        %v1023 = vsel %vm888, %v755, 0
        %1025 = vmatpush.xpose.msra.mxu0 0.0
        %1026 = vmatpush.xpose.msra.mxu0 0.0
        %1027 = vmatpush.xpose.msra.mxu0 0.0
        %1028 = vmatpush.xpose.msra.mxu0 0.0
        %1029 = vmatpush.xpose.msra.mxu0 0.0
        %1030 = vmatpush.xpose.msra.mxu0 0.0
        %1031 = vmatpush.xpose.msra.mxu0 0.0
        %1032 = vmatpush.xpose.msra.mxu0 0.0
        %1033 = vmatpush.xpose.msra.mxu0 0.0
        %1034 = vmatpush.xpose.msra.mxu0 0.0
        %1035 = vmatpush.xpose.msra.mxu0 0.0
        %1036 = vmatpush.xpose.msra.mxu0 0.0
        %1037 = vmatpush.xpose.msra.mxu0 0.0
        %1038 = vmatpush.xpose.msra.mxu0 0.0
        %1039 = vmatpush.xpose.msra.mxu0 0.0
        %1040 = vmatpush.xpose.msra.mxu0 %v1023
        %1041 = vmatmul.f32.gmra.mxu0 %v1020
        %v1042 = vpop.f32.mrf.mxu0
        %v1043 = vadd.f32 0.0, %v1042
        %1044 = vdwg.mxu0
        %v1046 = vsel %vm888, %v886, 0
        %v1049 = vsel %vm888, %v757, 0
        %1051 = vmatpush.xpose.msra.mxu0 0.0
        %1052 = vmatpush.xpose.msra.mxu0 0.0
        %1053 = vmatpush.xpose.msra.mxu0 0.0
        %1054 = vmatpush.xpose.msra.mxu0 0.0
        %1055 = vmatpush.xpose.msra.mxu0 0.0
        %1056 = vmatpush.xpose.msra.mxu0 0.0
        %1057 = vmatpush.xpose.msra.mxu0 0.0
        %1058 = vmatpush.xpose.msra.mxu0 0.0
        %1059 = vmatpush.xpose.msra.mxu0 0.0
        %1060 = vmatpush.xpose.msra.mxu0 0.0
        %1061 = vmatpush.xpose.msra.mxu0 0.0
        %1062 = vmatpush.xpose.msra.mxu0 0.0
        %1063 = vmatpush.xpose.msra.mxu0 0.0
        %1064 = vmatpush.xpose.msra.mxu0 0.0
        %1065 = vmatpush.xpose.msra.mxu0 0.0
        %1066 = vmatpush.xpose.msra.mxu0 %v1049
        %1067 = vmatmul.f32.gmra.mxu0 %v1046
        %v1068 = vpop.f32.mrf.mxu0
        %v1069 = vadd.f32 0.0, %v1068
        %1070 = vdwg.mxu0
        %v1072 = vsel %vm888, %v887, 0
        %v1075 = vsel %vm888, %v759, 0
        %1077 = vmatpush.xpose.msra.mxu0 0.0
        %1078 = vmatpush.xpose.msra.mxu0 0.0
        %1079 = vmatpush.xpose.msra.mxu0 0.0
        %1080 = vmatpush.xpose.msra.mxu0 0.0
        %1081 = vmatpush.xpose.msra.mxu0 0.0
        %1082 = vmatpush.xpose.msra.mxu0 0.0
        %1083 = vmatpush.xpose.msra.mxu0 0.0
        %1084 = vmatpush.xpose.msra.mxu0 0.0
        %1085 = vmatpush.xpose.msra.mxu0 0.0
        %1086 = vmatpush.xpose.msra.mxu0 0.0
        %1087 = vmatpush.xpose.msra.mxu0 0.0
        %1088 = vmatpush.xpose.msra.mxu0 0.0
        %1089 = vmatpush.xpose.msra.mxu0 0.0
        %1090 = vmatpush.xpose.msra.mxu0 0.0
        %1091 = vmatpush.xpose.msra.mxu0 0.0
        %1092 = vmatpush.xpose.msra.mxu0 %v1075
        %1093 = vmatmul.f32.gmra.mxu0 %v1072
        %v1094 = vpop.f32.mrf.mxu0
        %v1095 = vadd.f32 0.0, %v1094
        %1096 = vdwg.mxu0
        %v1097 = vld [vmem:[#allocation3] sm:$0xff]
        %v1098 = vld [vmem:[#allocation3 + $0x8] sm:$0xff]
        %v1099 = vld [vmem:[#allocation3 + $0x10] sm:$0xff]
        %v1100 = vld [vmem:[#allocation3 + $0x18] sm:$0xff]
        %v1101 = vld [vmem:[#allocation3 + $0x20] sm:$0xff]
        %v1102 = vld [vmem:[#allocation3 + $0x28] sm:$0xff]
        %v1103 = vld [vmem:[#allocation3 + $0x30] sm:$0xff]
        %v1104 = vld [vmem:[#allocation3 + $0x38] sm:$0xff]
        %v1105 = vsel %vm888, %v913, -inf
        %1106 = vmax.xlane.f32.xlu0 %v1105
        %v1107 = vpop.xlane.xlu0 %1106
        %v1108 = vsel %vm888, %v939, -inf
        %1109 = vmax.xlane.f32.xlu0 %v1108
        %v1110 = vpop.xlane.xlu0 %1109
        %v1111 = vsel %vm888, %v965, -inf
        %1112 = vmax.xlane.f32.xlu0 %v1111
        %v1113 = vpop.xlane.xlu0 %1112
        %v1114 = vsel %vm888, %v991, -inf
        %1115 = vmax.xlane.f32.xlu0 %v1114
        %v1116 = vpop.xlane.xlu0 %1115
        %v1117 = vsel %vm888, %v1017, -inf
        %1118 = vmax.xlane.f32.xlu0 %v1117
        %v1119 = vpop.xlane.xlu0 %1118
        %v1120 = vsel %vm888, %v1043, -inf
        %1121 = vmax.xlane.f32.xlu0 %v1120
        %v1122 = vpop.xlane.xlu0 %1121
        %v1123 = vsel %vm888, %v1069, -inf
        %1124 = vmax.xlane.f32.xlu0 %v1123
        %v1125 = vpop.xlane.xlu0 %1124
        %v1126 = vsel %vm888, %v1095, -inf
        %1127 = vmax.xlane.f32.xlu0 %v1126
        %v1128 = vpop.xlane.xlu0 %1127
        %v1129 = vmax.f32 %v1097, %v1107
        %v1130 = vmax.f32 %v1098, %v1110
        %v1131 = vmax.f32 %v1099, %v1113
        %v1132 = vmax.f32 %v1100, %v1116
        %v1133 = vmax.f32 %v1101, %v1119
        %v1134 = vmax.f32 %v1102, %v1122
        %v1135 = vmax.f32 %v1103, %v1125
        %v1136 = vmax.f32 %v1104, %v1128
        %v1137 = vsub.f32 %v1097, %v1129
        %v1138 = vsub.f32 %v1098, %v1130
        %v1139 = vsub.f32 %v1099, %v1131
        %v1140 = vsub.f32 %v1100, %v1132
        %v1141 = vsub.f32 %v1101, %v1133
        %v1142 = vsub.f32 %v1102, %v1134
        %v1143 = vsub.f32 %v1103, %v1135
        %v1144 = vsub.f32 %v1104, %v1136
        %v1145 = vmul.f32 %v1137, 1.442695
        %v1146 = vpow.pop %v1145
        %v1147 = vmul.f32 %v1138, 1.442695
        %v1148 = vpow.pop %v1147
        %v1149 = vmul.f32 %v1139, 1.442695
        %v1150 = vpow.pop %v1149
        %v1151 = vmul.f32 %v1140, 1.442695
        %v1152 = vpow.pop %v1151
        %v1153 = vmul.f32 %v1141, 1.442695
        %v1154 = vpow.pop %v1153
        %v1155 = vmul.f32 %v1142, 1.442695
        %v1156 = vpow.pop %v1155
        %v1157 = vmul.f32 %v1143, 1.442695
        %v1158 = vpow.pop %v1157
        %v1159 = vmul.f32 %v1144, 1.442695
        %v1160 = vpow.pop %v1159
        %1162 = vset.pattern.permute.xlu0 0
        %1163 = vperm.xlu0 %1162, %v1129
        %v1164 = vpop.permute.xlu0 %1163
        %1167 = vset.pattern.permute.xlu0 0
        %1168 = vperm.xlu0 %1167, %v1130
        %v1169 = vpop.permute.xlu0 %1168
        %1172 = vset.pattern.permute.xlu0 0
        %1173 = vperm.xlu0 %1172, %v1131
        %v1174 = vpop.permute.xlu0 %1173
        %1177 = vset.pattern.permute.xlu0 0
        %1178 = vperm.xlu0 %1177, %v1132
        %v1179 = vpop.permute.xlu0 %1178
        %1182 = vset.pattern.permute.xlu0 0
        %1183 = vperm.xlu0 %1182, %v1133
        %v1184 = vpop.permute.xlu0 %1183
        %1187 = vset.pattern.permute.xlu0 0
        %1188 = vperm.xlu0 %1187, %v1134
        %v1189 = vpop.permute.xlu0 %1188
        %1192 = vset.pattern.permute.xlu0 0
        %1193 = vperm.xlu0 %1192, %v1135
        %v1194 = vpop.permute.xlu0 %1193
        %1197 = vset.pattern.permute.xlu0 0
        %1198 = vperm.xlu0 %1197, %v1136
        %v1199 = vpop.permute.xlu0 %1198
        %v1201 = vsub.f32 %v913, %v1164
        %v1202 = vsub.f32 %v939, %v1169
        %v1203 = vsub.f32 %v965, %v1174
        %v1204 = vsub.f32 %v991, %v1179
        %v1205 = vsub.f32 %v1017, %v1184
        %v1206 = vsub.f32 %v1043, %v1189
        %v1207 = vsub.f32 %v1069, %v1194
        %v1208 = vsub.f32 %v1095, %v1199
        %v1209 = vmul.f32 %v1201, 1.442695
        %v1210 = vpow.pop %v1209
        %v1211 = vmul.f32 %v1202, 1.442695
        %v1212 = vpow.pop %v1211
        %v1213 = vmul.f32 %v1203, 1.442695
        %v1214 = vpow.pop %v1213
        %v1215 = vmul.f32 %v1204, 1.442695
        %v1216 = vpow.pop %v1215
        %v1217 = vmul.f32 %v1205, 1.442695
        %v1218 = vpow.pop %v1217
        %v1219 = vmul.f32 %v1206, 1.442695
        %v1220 = vpow.pop %v1219
        %v1221 = vmul.f32 %v1207, 1.442695
        %v1222 = vpow.pop %v1221
        %v1223 = vmul.f32 %v1208, 1.442695
        %v1224 = vpow.pop %v1223
        %v1225 = vld [vmem:[#allocation4] sm:$0xff]
        %v1226 = vld [vmem:[#allocation4 + $0x8] sm:$0xff]
        %v1227 = vld [vmem:[#allocation4 + $0x10] sm:$0xff]
        %v1228 = vld [vmem:[#allocation4 + $0x18] sm:$0xff]
        %v1229 = vld [vmem:[#allocation4 + $0x20] sm:$0xff]
        %v1230 = vld [vmem:[#allocation4 + $0x28] sm:$0xff]
        %v1231 = vld [vmem:[#allocation4 + $0x30] sm:$0xff]
        %v1232 = vld [vmem:[#allocation4 + $0x38] sm:$0xff]
        %v1233 = vmul.f32 %v1146, %v1225
        %v1234 = vmul.f32 %v1148, %v1226
        %v1235 = vmul.f32 %v1150, %v1227
        %v1236 = vmul.f32 %v1152, %v1228
        %v1237 = vmul.f32 %v1154, %v1229
        %v1238 = vmul.f32 %v1156, %v1230
        %v1239 = vmul.f32 %v1158, %v1231
        %v1240 = vmul.f32 %v1160, %v1232
        %v1241 = vsel %vm888, %v1210, 0.0
        %1242 = vadd.xlane.f32.xlu0 %v1241
        %v1243 = vpop.xlane.xlu0 %1242
        %v1244 = vsel %vm888, %v1212, 0.0
        %1245 = vadd.xlane.f32.xlu0 %v1244
        %v1246 = vpop.xlane.xlu0 %1245
        %v1247 = vsel %vm888, %v1214, 0.0
        %1248 = vadd.xlane.f32.xlu0 %v1247
        %v1249 = vpop.xlane.xlu0 %1248
        %v1250 = vsel %vm888, %v1216, 0.0
        %1251 = vadd.xlane.f32.xlu0 %v1250
        %v1252 = vpop.xlane.xlu0 %1251
        %v1253 = vsel %vm888, %v1218, 0.0
        %1254 = vadd.xlane.f32.xlu0 %v1253
        %v1255 = vpop.xlane.xlu0 %1254
        %v1256 = vsel %vm888, %v1220, 0.0
        %1257 = vadd.xlane.f32.xlu0 %v1256
        %v1258 = vpop.xlane.xlu0 %1257
        %v1259 = vsel %vm888, %v1222, 0.0
        %1260 = vadd.xlane.f32.xlu0 %v1259
        %v1261 = vpop.xlane.xlu0 %1260
        %v1262 = vsel %vm888, %v1224, 0.0
        %1263 = vadd.xlane.f32.xlu0 %v1262
        %v1264 = vpop.xlane.xlu0 %1263
        %v1265 = vadd.f32 %v1233, %v1243
        %v1266 = vadd.f32 %v1234, %v1246
        %v1267 = vadd.f32 %v1235, %v1249
        %v1268 = vadd.f32 %v1236, %v1252
        %v1269 = vadd.f32 %v1237, %v1255
        %v1270 = vadd.f32 %v1238, %v1258
        %v1271 = vadd.f32 %v1239, %v1261
        %v1272 = vadd.f32 %v1240, %v1264
        %vm1273 = vcmask 7168
        %1274 = vst.msk [vmem:[#allocation4] sm:$0xff] %vm1273, %v1265
        %1275 = vst.msk [vmem:[#allocation4 + $0x8] sm:$0xff] %vm1273, %v1266
        %1276 = vst.msk [vmem:[#allocation4 + $0x10] sm:$0xff] %vm1273, %v1267
        %1277 = vst.msk [vmem:[#allocation4 + $0x18] sm:$0xff] %vm1273, %v1268
        %1278 = vst.msk [vmem:[#allocation4 + $0x20] sm:$0xff] %vm1273, %v1269
        %1279 = vst.msk [vmem:[#allocation4 + $0x28] sm:$0xff] %vm1273, %v1270
        %1280 = vst.msk [vmem:[#allocation4 + $0x30] sm:$0xff] %vm1273, %v1271
        %1281 = vst.msk [vmem:[#allocation4 + $0x38] sm:$0xff] %vm1273, %v1272
        %v1282 = vld [vmem:[#allocation5] sm:$0xff]
        %v1283 = vld [vmem:[#allocation5 + $0x8] sm:$0xff]
        %v1284 = vld [vmem:[#allocation5 + $0x10] sm:$0xff]
        %v1285 = vld [vmem:[#allocation5 + $0x18] sm:$0xff]
        %v1286 = vld [vmem:[#allocation5 + $0x20] sm:$0xff]
        %v1287 = vld [vmem:[#allocation5 + $0x28] sm:$0xff]
        %v1288 = vld [vmem:[#allocation5 + $0x30] sm:$0xff]
        %v1289 = vld [vmem:[#allocation5 + $0x38] sm:$0xff]
        %1291 = vset.pattern.permute.xlu0 0
        %1292 = vperm.xlu0 %1291, %v1146
        %v1293 = vpop.permute.xlu0 %1292
        %1296 = vset.pattern.permute.xlu0 0
        %1297 = vperm.xlu0 %1296, %v1148
        %v1298 = vpop.permute.xlu0 %1297
        %1301 = vset.pattern.permute.xlu0 0
        %1302 = vperm.xlu0 %1301, %v1150
        %v1303 = vpop.permute.xlu0 %1302
        %1306 = vset.pattern.permute.xlu0 0
        %1307 = vperm.xlu0 %1306, %v1152
        %v1308 = vpop.permute.xlu0 %1307
        %1311 = vset.pattern.permute.xlu0 0
        %1312 = vperm.xlu0 %1311, %v1154
        %v1313 = vpop.permute.xlu0 %1312
        %1316 = vset.pattern.permute.xlu0 0
        %1317 = vperm.xlu0 %1316, %v1156
        %v1318 = vpop.permute.xlu0 %1317
        %1321 = vset.pattern.permute.xlu0 0
        %1322 = vperm.xlu0 %1321, %v1158
        %v1323 = vpop.permute.xlu0 %1322
        %1326 = vset.pattern.permute.xlu0 0
        %1327 = vperm.xlu0 %1326, %v1160
        %v1328 = vpop.permute.xlu0 %1327
        %v1330 = vmul.f32 %v1293, %v1282
        %v1331 = vmul.f32 %v1298, %v1283
        %v1332 = vmul.f32 %v1303, %v1284
        %v1333 = vmul.f32 %v1308, %v1285
        %v1334 = vmul.f32 %v1313, %v1286
        %v1335 = vmul.f32 %v1318, %v1287
        %v1336 = vmul.f32 %v1323, %v1288
        %v1337 = vmul.f32 %v1328, %v1289
        %v1339 = vsel %vm888, %v1210, 0
        %1341 = vmatpush.msra.mxu0 0.0
        %1342 = vmatpush.msra.mxu0 0.0
        %1343 = vmatpush.msra.mxu0 0.0
        %1344 = vmatpush.msra.mxu0 0.0
        %1345 = vmatpush.msra.mxu0 0.0
        %1346 = vmatpush.msra.mxu0 0.0
        %1347 = vmatpush.msra.mxu0 0.0
        %1348 = vmatpush.msra.mxu0 0.0
        %1349 = vmatpush.msra.mxu0 0.0
        %1350 = vmatpush.msra.mxu0 0.0
        %1351 = vmatpush.msra.mxu0 0.0
        %1352 = vmatpush.msra.mxu0 0.0
        %1353 = vmatpush.msra.mxu0 0.0
        %1354 = vmatpush.msra.mxu0 0.0
        %1355 = vmatpush.msra.mxu0 0.0
        %1356 = vmatpush.msra.mxu0 %v865
        %1357 = vmatmul.f32.gmra.mxu0 %v1339
        %v1358 = vpop.f32.mrf.mxu0
        %v1359 = vadd.f32 0.0, %v1358
        %1360 = vdwg.mxu0
        %v1362 = vsel %vm888, %v1212, 0
        %1364 = vmatpush.msra.mxu0 0.0
        %1365 = vmatpush.msra.mxu0 0.0
        %1366 = vmatpush.msra.mxu0 0.0
        %1367 = vmatpush.msra.mxu0 0.0
        %1368 = vmatpush.msra.mxu0 0.0
        %1369 = vmatpush.msra.mxu0 0.0
        %1370 = vmatpush.msra.mxu0 0.0
        %1371 = vmatpush.msra.mxu0 0.0
        %1372 = vmatpush.msra.mxu0 0.0
        %1373 = vmatpush.msra.mxu0 0.0
        %1374 = vmatpush.msra.mxu0 0.0
        %1375 = vmatpush.msra.mxu0 0.0
        %1376 = vmatpush.msra.mxu0 0.0
        %1377 = vmatpush.msra.mxu0 0.0
        %1378 = vmatpush.msra.mxu0 0.0
        %1379 = vmatpush.msra.mxu0 %v867
        %1380 = vmatmul.f32.gmra.mxu0 %v1362
        %v1381 = vpop.f32.mrf.mxu0
        %v1382 = vadd.f32 0.0, %v1381
        %1383 = vdwg.mxu0
        %v1385 = vsel %vm888, %v1214, 0
        %1387 = vmatpush.msra.mxu0 0.0
        %1388 = vmatpush.msra.mxu0 0.0
        %1389 = vmatpush.msra.mxu0 0.0
        %1390 = vmatpush.msra.mxu0 0.0
        %1391 = vmatpush.msra.mxu0 0.0
        %1392 = vmatpush.msra.mxu0 0.0
        %1393 = vmatpush.msra.mxu0 0.0
        %1394 = vmatpush.msra.mxu0 0.0
        %1395 = vmatpush.msra.mxu0 0.0
        %1396 = vmatpush.msra.mxu0 0.0
        %1397 = vmatpush.msra.mxu0 0.0
        %1398 = vmatpush.msra.mxu0 0.0
        %1399 = vmatpush.msra.mxu0 0.0
        %1400 = vmatpush.msra.mxu0 0.0
        %1401 = vmatpush.msra.mxu0 0.0
        %1402 = vmatpush.msra.mxu0 %v869
        %1403 = vmatmul.f32.gmra.mxu0 %v1385
        %v1404 = vpop.f32.mrf.mxu0
        %v1405 = vadd.f32 0.0, %v1404
        %1406 = vdwg.mxu0
        %v1408 = vsel %vm888, %v1216, 0
        %1410 = vmatpush.msra.mxu0 0.0
        %1411 = vmatpush.msra.mxu0 0.0
        %1412 = vmatpush.msra.mxu0 0.0
        %1413 = vmatpush.msra.mxu0 0.0
        %1414 = vmatpush.msra.mxu0 0.0
        %1415 = vmatpush.msra.mxu0 0.0
        %1416 = vmatpush.msra.mxu0 0.0
        %1417 = vmatpush.msra.mxu0 0.0
        %1418 = vmatpush.msra.mxu0 0.0
        %1419 = vmatpush.msra.mxu0 0.0
        %1420 = vmatpush.msra.mxu0 0.0
        %1421 = vmatpush.msra.mxu0 0.0
        %1422 = vmatpush.msra.mxu0 0.0
        %1423 = vmatpush.msra.mxu0 0.0
        %1424 = vmatpush.msra.mxu0 0.0
        %1425 = vmatpush.msra.mxu0 %v871
        %1426 = vmatmul.f32.gmra.mxu0 %v1408
        %v1427 = vpop.f32.mrf.mxu0
        %v1428 = vadd.f32 0.0, %v1427
        %1429 = vdwg.mxu0
        %v1431 = vsel %vm888, %v1218, 0
        %1433 = vmatpush.msra.mxu0 0.0
        %1434 = vmatpush.msra.mxu0 0.0
        %1435 = vmatpush.msra.mxu0 0.0
        %1436 = vmatpush.msra.mxu0 0.0
        %1437 = vmatpush.msra.mxu0 0.0
        %1438 = vmatpush.msra.mxu0 0.0
        %1439 = vmatpush.msra.mxu0 0.0
        %1440 = vmatpush.msra.mxu0 0.0
        %1441 = vmatpush.msra.mxu0 0.0
        %1442 = vmatpush.msra.mxu0 0.0
        %1443 = vmatpush.msra.mxu0 0.0
        %1444 = vmatpush.msra.mxu0 0.0
        %1445 = vmatpush.msra.mxu0 0.0
        %1446 = vmatpush.msra.mxu0 0.0
        %1447 = vmatpush.msra.mxu0 0.0
        %1448 = vmatpush.msra.mxu0 %v873
        %1449 = vmatmul.f32.gmra.mxu0 %v1431
        %v1450 = vpop.f32.mrf.mxu0
        %v1451 = vadd.f32 0.0, %v1450
        %1452 = vdwg.mxu0
        %v1454 = vsel %vm888, %v1220, 0
        %1456 = vmatpush.msra.mxu0 0.0
        %1457 = vmatpush.msra.mxu0 0.0
        %1458 = vmatpush.msra.mxu0 0.0
        %1459 = vmatpush.msra.mxu0 0.0
        %1460 = vmatpush.msra.mxu0 0.0
        %1461 = vmatpush.msra.mxu0 0.0
        %1462 = vmatpush.msra.mxu0 0.0
        %1463 = vmatpush.msra.mxu0 0.0
        %1464 = vmatpush.msra.mxu0 0.0
        %1465 = vmatpush.msra.mxu0 0.0
        %1466 = vmatpush.msra.mxu0 0.0
        %1467 = vmatpush.msra.mxu0 0.0
        %1468 = vmatpush.msra.mxu0 0.0
        %1469 = vmatpush.msra.mxu0 0.0
        %1470 = vmatpush.msra.mxu0 0.0
        %1471 = vmatpush.msra.mxu0 %v875
        %1472 = vmatmul.f32.gmra.mxu0 %v1454
        %v1473 = vpop.f32.mrf.mxu0
        %v1474 = vadd.f32 0.0, %v1473
        %1475 = vdwg.mxu0
        %v1477 = vsel %vm888, %v1222, 0
        %1479 = vmatpush.msra.mxu0 0.0
        %1480 = vmatpush.msra.mxu0 0.0
        %1481 = vmatpush.msra.mxu0 0.0
        %1482 = vmatpush.msra.mxu0 0.0
        %1483 = vmatpush.msra.mxu0 0.0
        %1484 = vmatpush.msra.mxu0 0.0
        %1485 = vmatpush.msra.mxu0 0.0
        %1486 = vmatpush.msra.mxu0 0.0
        %1487 = vmatpush.msra.mxu0 0.0
        %1488 = vmatpush.msra.mxu0 0.0
        %1489 = vmatpush.msra.mxu0 0.0
        %1490 = vmatpush.msra.mxu0 0.0
        %1491 = vmatpush.msra.mxu0 0.0
        %1492 = vmatpush.msra.mxu0 0.0
        %1493 = vmatpush.msra.mxu0 0.0
        %1494 = vmatpush.msra.mxu0 %v877
        %1495 = vmatmul.f32.gmra.mxu0 %v1477
        %v1496 = vpop.f32.mrf.mxu0
        %v1497 = vadd.f32 0.0, %v1496
        %1498 = vdwg.mxu0
        %v1500 = vsel %vm888, %v1224, 0
        %1502 = vmatpush.msra.mxu0 0.0
        %1503 = vmatpush.msra.mxu0 0.0
        %1504 = vmatpush.msra.mxu0 0.0
        %1505 = vmatpush.msra.mxu0 0.0
        %1506 = vmatpush.msra.mxu0 0.0
        %1507 = vmatpush.msra.mxu0 0.0
        %1508 = vmatpush.msra.mxu0 0.0
        %1509 = vmatpush.msra.mxu0 0.0
        %1510 = vmatpush.msra.mxu0 0.0
        %1511 = vmatpush.msra.mxu0 0.0
        %1512 = vmatpush.msra.mxu0 0.0
        %1513 = vmatpush.msra.mxu0 0.0
        %1514 = vmatpush.msra.mxu0 0.0
        %1515 = vmatpush.msra.mxu0 0.0
        %1516 = vmatpush.msra.mxu0 0.0
        %1517 = vmatpush.msra.mxu0 %v879
        %1518 = vmatmul.f32.gmra.mxu0 %v1500
        %v1519 = vpop.f32.mrf.mxu0
        %v1520 = vadd.f32 0.0, %v1519
        %1521 = vdwg.mxu0
        %v1522 = vadd.f32 %v1330, %v1359
        %v1523 = vadd.f32 %v1331, %v1382
        %v1524 = vadd.f32 %v1332, %v1405
        %v1525 = vadd.f32 %v1333, %v1428
        %v1526 = vadd.f32 %v1334, %v1451
        %v1527 = vadd.f32 %v1335, %v1474
        %v1528 = vadd.f32 %v1336, %v1497
        %v1529 = vadd.f32 %v1337, %v1520
        %1530 = vst.msk [vmem:[#allocation5] sm:$0xff] %vm888, %v1522
        %1531 = vst.msk [vmem:[#allocation5 + $0x8] sm:$0xff] %vm888, %v1523
        %1532 = vst.msk [vmem:[#allocation5 + $0x10] sm:$0xff] %vm888, %v1524
        %1533 = vst.msk [vmem:[#allocation5 + $0x18] sm:$0xff] %vm888, %v1525
        %1534 = vst.msk [vmem:[#allocation5 + $0x20] sm:$0xff] %vm888, %v1526
        %1535 = vst.msk [vmem:[#allocation5 + $0x28] sm:$0xff] %vm888, %v1527
        %1536 = vst.msk [vmem:[#allocation5 + $0x30] sm:$0xff] %vm888, %v1528
        %1537 = vst.msk [vmem:[#allocation5 + $0x38] sm:$0xff] %vm888, %v1529
        %1538 = vst.msk [vmem:[#allocation3] sm:$0xff] %vm1273, %v1129
        %1539 = vst.msk [vmem:[#allocation3 + $0x8] sm:$0xff] %vm1273, %v1130
        %1540 = vst.msk [vmem:[#allocation3 + $0x10] sm:$0xff] %vm1273, %v1131
        %1541 = vst.msk [vmem:[#allocation3 + $0x18] sm:$0xff] %vm1273, %v1132
        %1542 = vst.msk [vmem:[#allocation3 + $0x20] sm:$0xff] %vm1273, %v1133
        %1543 = vst.msk [vmem:[#allocation3 + $0x28] sm:$0xff] %vm1273, %v1134
        %1544 = vst.msk [vmem:[#allocation3 + $0x30] sm:$0xff] %vm1273, %v1135
        %1545 = vst.msk [vmem:[#allocation3 + $0x38] sm:$0xff] %vm1273, %v1136
        // Predicated region
        $region151: #{attention_forward.4} parent=133 // pred_check
          %p1546 = pneg %p472
        $region152: #{attention_forward.4} parent=133 // pred_check_branch
          %1548 = sbr.rel (%p1546) target = $region154
        $region153: #{attention_forward.4} parent=133 // pred_region
          %v1549 = vld [vmem:[#allocation4] sm:$0xff]
          %v1550 = vld [vmem:[#allocation4 + $0x8] sm:$0xff]
          %v1551 = vld [vmem:[#allocation4 + $0x10] sm:$0xff]
          %v1552 = vld [vmem:[#allocation4 + $0x18] sm:$0xff]
          %v1553 = vld [vmem:[#allocation4 + $0x20] sm:$0xff]
          %v1554 = vld [vmem:[#allocation4 + $0x28] sm:$0xff]
          %v1555 = vld [vmem:[#allocation4 + $0x30] sm:$0xff]
          %v1556 = vld [vmem:[#allocation4 + $0x38] sm:$0xff]
          %v1557 = vrcp.pop %v1549
          %v1558 = vrcp.pop %v1550
          %v1559 = vrcp.pop %v1551
          %v1560 = vrcp.pop %v1552
          %v1561 = vrcp.pop %v1553
          %v1562 = vrcp.pop %v1554
          %v1563 = vrcp.pop %v1555
          %v1564 = vrcp.pop %v1556
          %v1565 = vmul.f32 %v1549, %v1557
          %v1566 = vmul.f32 %v1550, %v1558
          %v1567 = vmul.f32 %v1551, %v1559
          %v1568 = vmul.f32 %v1552, %v1560
          %v1569 = vmul.f32 %v1553, %v1561
          %v1570 = vmul.f32 %v1554, %v1562
          %v1571 = vmul.f32 %v1555, %v1563
          %v1572 = vmul.f32 %v1556, %v1564
          %v1573 = vsub.f32 2.0, %v1565
          %v1574 = vsub.f32 2.0, %v1566
          %v1575 = vsub.f32 2.0, %v1567
          %v1576 = vsub.f32 2.0, %v1568
          %v1577 = vsub.f32 2.0, %v1569
          %v1578 = vsub.f32 2.0, %v1570
          %v1579 = vsub.f32 2.0, %v1571
          %v1580 = vsub.f32 2.0, %v1572
          %v1581 = vmul.f32 %v1557, %v1573
          %v1582 = vmul.f32 %v1558, %v1574
          %v1583 = vmul.f32 %v1559, %v1575
          %v1584 = vmul.f32 %v1560, %v1576
          %v1585 = vmul.f32 %v1561, %v1577
          %v1586 = vmul.f32 %v1562, %v1578
          %v1587 = vmul.f32 %v1563, %v1579
          %v1588 = vmul.f32 %v1564, %v1580
          %v1589 = vld [vmem:[#allocation5] sm:$0xff]
          %v1590 = vld [vmem:[#allocation5 + $0x8] sm:$0xff]
          %v1591 = vld [vmem:[#allocation5 + $0x10] sm:$0xff]
          %v1592 = vld [vmem:[#allocation5 + $0x18] sm:$0xff]
          %v1593 = vld [vmem:[#allocation5 + $0x20] sm:$0xff]
          %v1594 = vld [vmem:[#allocation5 + $0x28] sm:$0xff]
          %v1595 = vld [vmem:[#allocation5 + $0x30] sm:$0xff]
          %v1596 = vld [vmem:[#allocation5 + $0x38] sm:$0xff]
          %1598 = vset.pattern.permute.xlu0 0
          %1599 = vperm.xlu0 %1598, %v1581
          %v1600 = vpop.permute.xlu0 %1599
          %1603 = vset.pattern.permute.xlu0 0
          %1604 = vperm.xlu0 %1603, %v1582
          %v1605 = vpop.permute.xlu0 %1604
          %1608 = vset.pattern.permute.xlu0 0
          %1609 = vperm.xlu0 %1608, %v1583
          %v1610 = vpop.permute.xlu0 %1609
          %1613 = vset.pattern.permute.xlu0 0
          %1614 = vperm.xlu0 %1613, %v1584
          %v1615 = vpop.permute.xlu0 %1614
          %1618 = vset.pattern.permute.xlu0 0
          %1619 = vperm.xlu0 %1618, %v1585
          %v1620 = vpop.permute.xlu0 %1619
          %1623 = vset.pattern.permute.xlu0 0
          %1624 = vperm.xlu0 %1623, %v1586
          %v1625 = vpop.permute.xlu0 %1624
          %1628 = vset.pattern.permute.xlu0 0
          %1629 = vperm.xlu0 %1628, %v1587
          %v1630 = vpop.permute.xlu0 %1629
          %1633 = vset.pattern.permute.xlu0 0
          %1634 = vperm.xlu0 %1633, %v1588
          %v1635 = vpop.permute.xlu0 %1634
          %v1637 = vmul.f32 %v1589, %v1600
          %v1638 = vmul.f32 %v1590, %v1605
          %v1639 = vmul.f32 %v1591, %v1610
          %v1640 = vmul.f32 %v1592, %v1615
          %v1641 = vmul.f32 %v1593, %v1620
          %v1642 = vmul.f32 %v1594, %v1625
          %v1643 = vmul.f32 %v1595, %v1630
          %v1644 = vmul.f32 %v1596, %v1635
          %v1645 = vrot.slane %v1639, 4
          %v1646 = vsel %vm648, %v1645, %v1637
          %v1647 = vrot.slane %v1637, 4
          %v1648 = vsel %vm648, %v1639, %v1647
          %v1650 = vunpack.c.l.s4 1983009808
          %v1651 = vunpack.c.0.s8 %v1650
          %v1652 = vperm.slane %v1646, %v1651
          %v1654 = vunpack.c.l.s4 1983009808
          %v1655 = vunpack.c.0.s8 %v1654
          %v1656 = vperm.slane %v1648, %v1655
          %v1657 = vrot.slane %v1640, 4
          %v1658 = vsel %vm648, %v1657, %v1638
          %v1659 = vrot.slane %v1638, 4
          %v1660 = vsel %vm648, %v1640, %v1659
          %v1662 = vunpack.c.l.s4 1983009808
          %v1663 = vunpack.c.0.s8 %v1662
          %v1664 = vperm.slane %v1658, %v1663
          %v1666 = vunpack.c.l.s4 1983009808
          %v1667 = vunpack.c.0.s8 %v1666
          %v1668 = vperm.slane %v1660, %v1667
          %v1669 = vrot.slane %v1643, 4
          %v1670 = vsel %vm648, %v1669, %v1641
          %v1671 = vrot.slane %v1641, 4
          %v1672 = vsel %vm648, %v1643, %v1671
          %v1674 = vunpack.c.l.s4 1983009808
          %v1675 = vunpack.c.0.s8 %v1674
          %v1676 = vperm.slane %v1670, %v1675
          %v1678 = vunpack.c.l.s4 1983009808
          %v1679 = vunpack.c.0.s8 %v1678
          %v1680 = vperm.slane %v1672, %v1679
          %v1681 = vrot.slane %v1644, 4
          %v1682 = vsel %vm648, %v1681, %v1642
          %v1683 = vrot.slane %v1642, 4
          %v1684 = vsel %vm648, %v1644, %v1683
          %v1686 = vunpack.c.l.s4 1983009808
          %v1687 = vunpack.c.0.s8 %v1686
          %v1688 = vperm.slane %v1682, %v1687
          %v1690 = vunpack.c.l.s4 1983009808
          %v1691 = vunpack.c.0.s8 %v1690
          %v1692 = vperm.slane %v1684, %v1691
          %v1693 = vrot.slane %v1664, 4
          %v1694 = vsel %vm648, %v1693, %v1652
          %v1695 = vrot.slane %v1652, 4
          %v1696 = vsel %vm648, %v1664, %v1695
          %v1698 = vunpack.c.l.s4 1934713408
          %v1699 = vunpack.c.0.s8 %v1698
          %v1700 = vperm.slane %v1694, %v1699
          %v1702 = vunpack.c.l.s4 1934713408
          %v1703 = vunpack.c.0.s8 %v1702
          %v1704 = vperm.slane %v1696, %v1703
          %v1705 = vrot.slane %v1668, 4
          %v1706 = vsel %vm648, %v1705, %v1656
          %v1707 = vrot.slane %v1656, 4
          %v1708 = vsel %vm648, %v1668, %v1707
          %v1710 = vunpack.c.l.s4 1934713408
          %v1711 = vunpack.c.0.s8 %v1710
          %v1712 = vperm.slane %v1706, %v1711
          %v1714 = vunpack.c.l.s4 1934713408
          %v1715 = vunpack.c.0.s8 %v1714
          %v1716 = vperm.slane %v1708, %v1715
          %v1717 = vrot.slane %v1688, 4
          %v1718 = vsel %vm648, %v1717, %v1676
          %v1719 = vrot.slane %v1676, 4
          %v1720 = vsel %vm648, %v1688, %v1719
          %v1722 = vunpack.c.l.s4 1934713408
          %v1723 = vunpack.c.0.s8 %v1722
          %v1724 = vperm.slane %v1718, %v1723
          %v1726 = vunpack.c.l.s4 1934713408
          %v1727 = vunpack.c.0.s8 %v1726
          %v1728 = vperm.slane %v1720, %v1727
          %v1729 = vrot.slane %v1692, 4
          %v1730 = vsel %vm648, %v1729, %v1680
          %v1731 = vrot.slane %v1680, 4
          %v1732 = vsel %vm648, %v1692, %v1731
          %v1734 = vunpack.c.l.s4 1934713408
          %v1735 = vunpack.c.0.s8 %v1734
          %v1736 = vperm.slane %v1730, %v1735
          %v1738 = vunpack.c.l.s4 1934713408
          %v1739 = vunpack.c.0.s8 %v1738
          %v1740 = vperm.slane %v1732, %v1739
          %v1741 = vrot.slane %v1724, 4
          %v1742 = vsel %vm648, %v1741, %v1700
          %v1743 = vrot.slane %v1700, 4
          %v1744 = vsel %vm648, %v1724, %v1743
          %v1745 = vrot.slane %v1728, 4
          %v1746 = vsel %vm648, %v1745, %v1704
          %v1747 = vrot.slane %v1704, 4
          %v1748 = vsel %vm648, %v1728, %v1747
          %v1749 = vrot.slane %v1736, 4
          %v1750 = vsel %vm648, %v1749, %v1712
          %v1751 = vrot.slane %v1712, 4
          %v1752 = vsel %vm648, %v1736, %v1751
          %v1753 = vrot.slane %v1740, 4
          %v1754 = vsel %vm648, %v1753, %v1716
          %v1755 = vrot.slane %v1716, 4
          %v1756 = vsel %vm648, %v1740, %v1755
          %v1757 = vrot.slane %v1746, 4
          %v1758 = vsel %vm648, %v1757, %v1742
          %v1759 = vrot.slane %v1742, 4
          %v1760 = vsel %vm648, %v1746, %v1759
          %v1762 = vunpack.c.l.s4 1983009808
          %v1763 = vunpack.c.0.s8 %v1762
          %v1764 = vperm.slane %v1758, %v1763
          %v1766 = vunpack.c.l.s4 1983009808
          %v1767 = vunpack.c.0.s8 %v1766
          %v1768 = vperm.slane %v1760, %v1767
          %v1769 = vrot.slane %v1748, 4
          %v1770 = vsel %vm648, %v1769, %v1744
          %v1771 = vrot.slane %v1744, 4
          %v1772 = vsel %vm648, %v1748, %v1771
          %v1774 = vunpack.c.l.s4 1983009808
          %v1775 = vunpack.c.0.s8 %v1774
          %v1776 = vperm.slane %v1770, %v1775
          %v1778 = vunpack.c.l.s4 1983009808
          %v1779 = vunpack.c.0.s8 %v1778
          %v1780 = vperm.slane %v1772, %v1779
          %v1781 = vrot.slane %v1754, 4
          %v1782 = vsel %vm648, %v1781, %v1750
          %v1783 = vrot.slane %v1750, 4
          %v1784 = vsel %vm648, %v1754, %v1783
          %v1786 = vunpack.c.l.s4 1983009808
          %v1787 = vunpack.c.0.s8 %v1786
          %v1788 = vperm.slane %v1782, %v1787
          %v1790 = vunpack.c.l.s4 1983009808
          %v1791 = vunpack.c.0.s8 %v1790
          %v1792 = vperm.slane %v1784, %v1791
          %v1793 = vrot.slane %v1756, 4
          %v1794 = vsel %vm648, %v1793, %v1752
          %v1795 = vrot.slane %v1752, 4
          %v1796 = vsel %vm648, %v1756, %v1795
          %v1798 = vunpack.c.l.s4 1983009808
          %v1799 = vunpack.c.0.s8 %v1798
          %v1800 = vperm.slane %v1794, %v1799
          %v1802 = vunpack.c.l.s4 1983009808
          %v1803 = vunpack.c.0.s8 %v1802
          %v1804 = vperm.slane %v1796, %v1803
          %v1805 = vrot.slane %v1776, 4
          %v1806 = vsel %vm648, %v1805, %v1764
          %v1807 = vrot.slane %v1764, 4
          %v1808 = vsel %vm648, %v1776, %v1807
          %v1810 = vunpack.c.l.s4 1934713408
          %v1811 = vunpack.c.0.s8 %v1810
          %v1812 = vperm.slane %v1806, %v1811
          %v1814 = vunpack.c.l.s4 1934713408
          %v1815 = vunpack.c.0.s8 %v1814
          %v1816 = vperm.slane %v1808, %v1815
          %v1817 = vrot.slane %v1780, 4
          %v1818 = vsel %vm648, %v1817, %v1768
          %v1819 = vrot.slane %v1768, 4
          %v1820 = vsel %vm648, %v1780, %v1819
          %v1822 = vunpack.c.l.s4 1934713408
          %v1823 = vunpack.c.0.s8 %v1822
          %v1824 = vperm.slane %v1818, %v1823
          %v1826 = vunpack.c.l.s4 1934713408
          %v1827 = vunpack.c.0.s8 %v1826
          %v1828 = vperm.slane %v1820, %v1827
          %v1829 = vrot.slane %v1800, 4
          %v1830 = vsel %vm648, %v1829, %v1788
          %v1831 = vrot.slane %v1788, 4
          %v1832 = vsel %vm648, %v1800, %v1831
          %v1834 = vunpack.c.l.s4 1934713408
          %v1835 = vunpack.c.0.s8 %v1834
          %v1836 = vperm.slane %v1830, %v1835
          %v1838 = vunpack.c.l.s4 1934713408
          %v1839 = vunpack.c.0.s8 %v1838
          %v1840 = vperm.slane %v1832, %v1839
          %v1841 = vrot.slane %v1804, 4
          %v1842 = vsel %vm648, %v1841, %v1792
          %v1843 = vrot.slane %v1792, 4
          %v1844 = vsel %vm648, %v1804, %v1843
          %v1846 = vunpack.c.l.s4 1934713408
          %v1847 = vunpack.c.0.s8 %v1846
          %v1848 = vperm.slane %v1842, %v1847
          %v1850 = vunpack.c.l.s4 1934713408
          %v1851 = vunpack.c.0.s8 %v1850
          %v1852 = vperm.slane %v1844, %v1851
          %v1853 = vrot.slane %v1836, 4
          %v1854 = vsel %vm648, %v1853, %v1812
          %v1855 = vrot.slane %v1812, 4
          %v1856 = vsel %vm648, %v1836, %v1855
          %v1857 = vrot.slane %v1840, 4
          %v1858 = vsel %vm648, %v1857, %v1816
          %v1859 = vrot.slane %v1816, 4
          %v1860 = vsel %vm648, %v1840, %v1859
          %v1861 = vrot.slane %v1848, 4
          %v1862 = vsel %vm648, %v1861, %v1824
          %v1863 = vrot.slane %v1824, 4
          %v1864 = vsel %vm648, %v1848, %v1863
          %v1865 = vrot.slane %v1852, 4
          %v1866 = vsel %vm648, %v1865, %v1828
          %v1867 = vrot.slane %v1828, 4
          %v1868 = vsel %vm648, %v1852, %v1867
          %1870 = vrot.lane.b32.xlu0 %v1856, 8
          %v1871 = vpop.permute.xlu0 %1870
          %1874 = vrot.lane.b32.xlu0 %v1858, 16
          %v1875 = vpop.permute.xlu0 %1874
          %1878 = vrot.lane.b32.xlu0 %v1860, 24
          %v1879 = vpop.permute.xlu0 %1878
          %1882 = vrot.lane.b32.xlu0 %v1862, 32
          %v1883 = vpop.permute.xlu0 %1882
          %1886 = vrot.lane.b32.xlu0 %v1864, 40
          %v1887 = vpop.permute.xlu0 %1886
          %1890 = vrot.lane.b32.xlu0 %v1866, 48
          %v1891 = vpop.permute.xlu0 %1890
          %1894 = vrot.lane.b32.xlu0 %v1868, 56
          %v1895 = vpop.permute.xlu0 %1894
          %v1897 = vsel %vm888, %v1854, %v1871
          %vm1898 = vcmask 130048
          %v1899 = vsel %vm1898, %v1897, %v1875
          %vm1900 = vcmask 195584
          %v1901 = vsel %vm1900, %v1899, %v1879
          %vm1902 = vcmask 261120
          %v1903 = vsel %vm1902, %v1901, %v1883
          %vm1904 = vcmask 326656
          %v1905 = vsel %vm1904, %v1903, %v1887
          %vm1906 = vcmask 392192
          %v1907 = vsel %vm1906, %v1905, %v1891
          %vm1908 = vcmask 457728
          %v1909 = vsel %vm1908, %v1907, %v1895
          %vm1910 = vcmask 523264
          %1911 = vst.msk [vmem:[%s471] sm:$0xff] %vm1910, %v1909
        $region154: #{attention_forward.4} parent=133 // pred_fallthru
          _
        %p1912 = scmp.lt.s32.totalorder %s20, 1
        %s1913 = scalar_select %p1912, %s20, 1
        %p1914 = scmp.lt.s32.totalorder %s22, 0
        %s1915 = scalar_select %p1914, %s22, 0
        %p1916 = scmp.lt.s32.totalorder %s21, 0
        %s1917 = scalar_select %p1916, %s21, 0
        %s1918 = sadd.s32 %s1917, %s1915
        %s1919 = sadd.s32 %s1918, %s1913
        %s1920 = smul.addr %s1919, 8
        %s1921 = scalar_lea.vmem %s3, %s1920
        // Predicated region
        $region155: #{attention_forward.4} parent=133 // pred_check
          %p1922 = pneg %p152
        $region156: #{attention_forward.4} parent=133 // pred_check_branch
          %1924 = sbr.rel (%p1922) target = $region158
        $region157: #{attention_forward.4} parent=133 // pred_region
          _
        $region158: #{attention_forward.4} parent=133 // pred_fallthru
          _
      $region134: #{attention_forward.4} parent=5 // pred_fallthru
        _
      %p1925 = scmp.le.s32.totalorder 2, %s9
      // Predicated region
      $region159: #{attention_forward.4} parent=5 // pred_check
        %p1926 = pneg %p1925
      $region160: #{attention_forward.4} parent=5 // pred_check_branch
        %1928 = sbr.rel (%p1926) target = $region162
      $region161: #{attention_forward.4} parent=5 // pred_region
        %s1929 = ssub.s32 %s9, 2
        // Predicated region
        $region163: #{attention_forward.4} parent=161 // pred_check
          %p1930 = pneg %p158
        $region164: #{attention_forward.4} parent=161 // pred_check_branch
          %1932 = sbr.rel (%p1930) target = $region166
        $region165: #{attention_forward.4} parent=161 // pred_region
          %p1933 = scmp.lt.s32.totalorder %s24, 1
          %s1934 = scalar_select %p1933, %s24, 1
          %p1935 = scmp.lt.s32.totalorder %s26, 0
          %s1936 = scalar_select %p1935, %s26, 0
          %p1937 = scmp.lt.s32.totalorder %s25, 0
          %s1938 = scalar_select %p1937, %s25, 0
          %s1939 = sadd.s32 %s1938, %s1936
          %s1940 = sadd.s32 %s1939, %s1934
          %s1941 = smul.addr %s1940, 8
          %s1942 = scalar_lea.vmem %s3, %s1941
        $region166: #{attention_forward.4} parent=161 // pred_fallthru
          _
      $region162: #{attention_forward.4} parent=5 // pred_fallthru
        _
    $region6: #{attention_forward.4} parent=1 // loop_footer
      %s13 = sadd.s32 1, %s9
    $region7: #{attention_forward.4} parent=1 // loop_footer_branch
      %8 = sbr.rel target = $region3
    $region8: #{attention_forward.4} parent=1 // loop_exit
      _

</llo_original>
